<compile_context>
chip_gen: v7x
topology: tpu7x:2x2x1
jax: 0.10.0
libtpu: 0.0.40
codegen_flags: <defaults>
</compile_context>

<pallas_src>
import jax
import jax.numpy as jnp
from jax import lax
from jax.experimental import pallas as pl
from jax.experimental.pallas import tpu as pltpu

NEG_SLOPE = 0.2              # GATConv default negative_slope
F_PAD = 128                  # lane width: all feature dims zero-padded to this
ED_COL = F_PAD - 1           # W_aug column holding W @ a_dst  -> ed_i
DENOM_COL = F_PAD - 2        # h_aug column set to 1.0         -> softmax denom
BIG = 1e30                   # additive mask magnitude for non-edges
MATMUL_DTYPE = jnp.bfloat16  # MXU operand dtype (set jnp.float32 for bit parity)
N_LAYERS = 5


def gae_fused_kernel(x_ref, adj_ref, w_ref, asrc_ref, b_ref, xrec_ref, s_ref):
    """One graph per grid step: 5 dense single-head GATConv layers + dot decoder.

    x_ref    : [1, N, F_PAD]      bf16  node features (zero-padded)
    adj_ref  : [1, N, N]          int8  adj[i,j] = 1 iff edge j -> i (self-loops incl.)
    w_ref    : [NL, F_PAD, F_PAD] bf16  weights; column ED_COL holds W @ a_dst
    asrc_ref : [NL, 1, F_PAD]     bf16  W @ a_src (row-major, lane-dense)
    b_ref    : [NL, 1, F_PAD]     f32   bias (zero-padded)
    xrec_ref : [1, N, F_PAD]      f32   attribute reconstruction (padded)
    s_ref    : [1, N, N]          f32   structure reconstruction
    """
    n = adj_ref.shape[1]
    # 0 on edges, -1e30 on non-edges.  Every row carries a self-loop, so each
    # softmax row is guaranteed at least one finite entry (invariant required
    # for the max/exp below).
    adj_bias = (adj_ref[0].astype(jnp.float32) - 1.0) * BIG          # [N, N]
    col = lax.broadcasted_iota(jnp.int32, (n, F_PAD), 1)             # hoisted

    def gat(x, l, relu):
        # x: [N, F_PAD] bf16.  Garbage is allowed in cols >= the layer's real
        # f_in because the corresponding rows of W_aug / a_src are zero.
        # One MXU pass gives h (real cols) and ed_i = a_dst.(W x_i) in ED_COL.
        h_aug = jnp.dot(x, w_ref[l], preferred_element_type=jnp.float32)  # [N,F]
        ed = h_aug[:, ED_COL:ED_COL + 1]                                  # [N,1]
        # es_j = a_src.(W x_j), produced lane-major as [1, N] (trans-B dot).
        es = lax.dot_general(asrc_ref[l], x, (((1,), (1,)), ((), ())),
                             preferred_element_type=jnp.float32)          # [1,N]
        e = ed + es                                    # e[i,j] for edge j -> i
        e = jnp.where(e > 0, e, NEG_SLOPE * e)         # LeakyReLU (f32, VPU)
        e = e + adj_bias                               # -1e30 on non-edges
        m = jnp.max(e, axis=1, keepdims=True)
        p = jnp.exp(e - m)                             # unnormalized attention
        # Fold the softmax denominator into the aggregation matmul: a padded
        # column of h_aug becomes 1.0 so (p @ h_aug)[:, DENOM_COL] = sum_j p.
        h_aug = jnp.where(col == DENOM_COL, 1.0, h_aug)
        out = jnp.dot(p.astype(MATMUL_DTYPE), h_aug.astype(MATMUL_DTYPE),
                      preferred_element_type=jnp.float32)                 # [N,F]
        denom = out[:, DENOM_COL:DENOM_COL + 1]
        out = out * pl.reciprocal(denom, approx=True) + b_ref[l]
        if relu:
            out = jnp.maximum(out, 0.0)
        # cols >= real f_out are exactly 0 except DENOM_COL (~1) / ED_COL (junk);
        # those never reach real math because the next layer's W rows there are 0.
        return out

    # TODO(synk): for large N, row-tile queries / column-tile keys with an
    # online softmax so the [N,N] attention temporaries are not fully
    # VMEM-resident and stay >=128 lanes wide; trivial at this test size.
    x = x_ref[0]
    h = gat(x, 0, True).astype(MATMUL_DTYPE)      # encoder layer 1
    emb = gat(h, 1, False).astype(MATMUL_DTYPE)   # encoder layer 2 -> embedding
    h = gat(emb, 2, True).astype(MATMUL_DTYPE)    # attribute decoder layer 1
    xrec_ref[0] = gat(h, 3, False)                # attribute decoder layer 2
    # Structure decoder: 1-layer GAT (PyG BasicGNN applies no activation after
    # its final conv), then dot-product decode.  Zero the two bookkeeping
    # columns so they don't leak into h @ h.T.
    hs = gat(emb, 4, False)
    hs = jnp.where(col >= DENOM_COL, 0.0, hs).astype(MATMUL_DTYPE)
    s_ref[0] = lax.dot_general(hs, hs, (((1,), (1,)), ((), ())),
                               preferred_element_type=jnp.float32)


def _pack_layer(layer_params):
    """(w[f_in,f_out], a_src[f_out], a_dst[f_out], b[f_out]) -> fused tensors."""
    w, a_src, a_dst, b = layer_params
    f_in, f_out = w.shape
    assert f_in <= DENOM_COL and f_out <= DENOM_COL, "feature dim too large for F_PAD"
    wa_src = w @ a_src            # [f_in]: es_j = x_j . (W a_src)
    wa_dst = w @ a_dst            # [f_in]: ed_i = x_i . (W a_dst)
    w_aug = jnp.zeros((F_PAD, F_PAD), jnp.float32)
    w_aug = w_aug.at[:f_in, :f_out].set(w)
    w_aug = w_aug.at[:f_in, ED_COL].set(wa_dst)    # fold ed into the h matmul
    asrc = jnp.zeros((1, F_PAD), jnp.float32).at[0, :f_in].set(wa_src)
    bias = jnp.zeros((1, F_PAD), jnp.float32).at[0, :f_out].set(b)
    return w_aug.astype(MATMUL_DTYPE), asrc.astype(MATMUL_DTYPE), bias


def gae_forward(x, adj, params):
    """x: [B,N,in_dim] (or [N,in_dim]); adj: [B,N,N] (or [N,N]) 0/1 with self-loops."""
    squeeze = x.ndim == 2
    if squeeze:
        x, adj = x[None], adj[None]
    bsz, n, in_dim = x.shape
    assert adj.shape == (bsz, n, n)
    assert n % 8 == 0, "pad node count to a multiple of 8 (sublane tiling)"

    layers = [params[k] for k in ("enc1", "enc2", "dec1", "dec2", "struct1")]
    packed = [_pack_layer(p) for p in layers]
    w_all = jnp.stack([p[0] for p in packed])      # [5, F_PAD, F_PAD] bf16
    asrc_all = jnp.stack([p[1] for p in packed])   # [5, 1, F_PAD]     bf16
    b_all = jnp.stack([p[2] for p in packed])      # [5, 1, F_PAD]     f32

    x_pad = jnp.zeros((bsz, n, F_PAD), MATMUL_DTYPE)
    x_pad = x_pad.at[:, :, :in_dim].set(x.astype(MATMUL_DTYPE))
    adj_i8 = (adj > 0).astype(jnp.int8)            # compact 0/1 mask in HBM

    flops = bsz * (N_LAYERS * (2 * n * F_PAD * F_PAD     # x @ W_aug
                               + 2 * n * F_PAD           # es dot
                               + 2 * n * n * F_PAD       # p @ h_aug
                               + 8 * n * n)              # attention elementwise
                   + 2 * n * n * F_PAD)                  # h @ h.T
    transcendentals = bsz * N_LAYERS * (n * n + n)
    bytes_accessed = (bsz * (2 * n * F_PAD + n * n + 4 * n * F_PAD + 4 * n * n)
                      + N_LAYERS * (2 * F_PAD * F_PAD + 2 * F_PAD + 4 * F_PAD))

    x_rec_pad, s_ = pl.pallas_call(
        gae_fused_kernel,
        out_shape=(jax.ShapeDtypeStruct((bsz, n, F_PAD), jnp.float32),
                   jax.ShapeDtypeStruct((bsz, n, n), jnp.float32)),
        grid=(bsz,),
        in_specs=[
            pl.BlockSpec((1, n, F_PAD), lambda b: (b, 0, 0)),          # x
            pl.BlockSpec((1, n, n), lambda b: (b, 0, 0)),              # adj mask
            pl.BlockSpec((N_LAYERS, F_PAD, F_PAD), lambda b: (0, 0, 0)),  # W_aug
            pl.BlockSpec((N_LAYERS, 1, F_PAD), lambda b: (0, 0, 0)),   # W a_src
            pl.BlockSpec((N_LAYERS, 1, F_PAD), lambda b: (0, 0, 0)),   # bias
        ],
        out_specs=(
            pl.BlockSpec((1, n, F_PAD), lambda b: (b, 0, 0)),
            pl.BlockSpec((1, n, n), lambda b: (b, 0, 0)),
        ),
        compiler_params=pltpu.CompilerParams(
            dimension_semantics=("parallel",),        # v7x: 2 TCs split graphs
            vmem_limit_bytes=32 * 1024 * 1024),
        cost_estimate=pl.CostEstimate(flops=flops,
                                      transcendentals=transcendentals,
                                      bytes_accessed=bytes_accessed),
    )(x_pad, adj_i8, w_all, asrc_all, b_all)

    x_rec = x_rec_pad[:, :, :in_dim]
    if squeeze:
        return x_rec[0], s_[0]
    return x_rec, s_


def init_gat_layer(key, f_in, f_out):
    k1, k2, k3 = jax.random.split(key, 3)
    scale = 1.0 / jnp.sqrt(jnp.float32(f_in))
    w = jax.random.normal(k1, (f_in, f_out), jnp.float32) * scale
    a_src = jax.random.normal(k2, (f_out,), jnp.float32) * 0.1
    a_dst = jax.random.normal(k3, (f_out,), jnp.float32) * 0.1
    b = jnp.zeros((f_out,), jnp.float32)
    return (w, a_src, a_dst, b)


def build_dense_adj(edge_index, num_nodes):
    # adj[i, j] = 1 iff edge j -> i; add self loops (GATConv default).
    src, dst = edge_index
    adj = jnp.zeros((num_nodes, num_nodes), jnp.float32)
    adj = adj.at[dst, src].set(1.0)
    adj = adj + jnp.eye(num_nodes, dtype=jnp.float32)
    return jnp.clip(adj, 0.0, 1.0)


if __name__ == "__main__":
    B = 2           # graphs per fused call (batched grid axis)
    N = 16          # nodes per graph
    IN_DIM = 8
    HID_DIM = 32

    key = jax.random.PRNGKey(0)
    kx, k1, k2, k3, k4, k5 = jax.random.split(key, 6)

    # deterministic node features for both graphs
    x = jax.random.normal(kx, (B, N, IN_DIM), jnp.float32)

    # deterministic small graphs: undirected ring + a few chords (per graph)
    def ring_graph(chords):
        src_list, dst_list = [], []
        for i in range(N):
            j = (i + 1) % N
            src_list += [i, j]
            dst_list += [j, i]
        for (a, c) in chords:
            src_list += [a, c]
            dst_list += [c, a]
        return jnp.array([src_list, dst_list], dtype=jnp.int32)

    edge_index_0 = ring_graph([(0, 8), (3, 11), (5, 13)])
    edge_index_1 = ring_graph([(1, 9), (2, 10), (6, 14), (4, 12)])
    adj = jnp.stack([build_dense_adj(edge_index_0, N),
                     build_dense_adj(edge_index_1, N)])

    params = {
        "enc1": init_gat_layer(k1, IN_DIM, HID_DIM),
        "enc2": init_gat_layer(k2, HID_DIM, HID_DIM),
        "dec1": init_gat_layer(k3, HID_DIM, HID_DIM),
        "dec2": init_gat_layer(k4, HID_DIM, IN_DIM),
        "struct1": init_gat_layer(k5, HID_DIM, HID_DIM),
    }

    x_, s_ = jax.jit(gae_forward)(x, adj, params)
    jax.block_until_ready((x_, s_))

    assert x_.shape == (B, N, IN_DIM) and x_.dtype == jnp.float32
    assert s_.shape == (B, N, N) and s_.dtype == jnp.float32
    assert bool(jnp.all(jnp.isfinite(x_))) and bool(jnp.all(jnp.isfinite(s_)))
    print("KERNEL_OK")
</pallas_src>

<mosaic_0001>
module attributes {stable_mosaic.version = 11 : i64} {
  func.func @gae_fused_kernel(%arg0: i32, %arg1: memref<1x16x128xbf16, #tpu.memory_space<vmem>>, %arg2: memref<1x16x16xi8, #tpu.memory_space<vmem>>, %arg3: memref<5x128x128xbf16, #tpu.memory_space<vmem>>, %arg4: memref<5x1x128xbf16, #tpu.memory_space<vmem>>, %arg5: memref<5x1x128xf32, #tpu.memory_space<vmem>>, %arg6: memref<1x16x128xf32, #tpu.memory_space<vmem>>, %arg7: memref<1x16x16xf32, #tpu.memory_space<vmem>>) attributes {dimension_semantics = [#tpu.dimension_semantics<parallel>], iteration_bounds = array<i64: 2>, scalar_prefetch = 0 : i64, scratch_operands = 0 : i64, tpu.core_type = #tpu.core_type<tc>, window_params = [{transform_indices = @transform_0, window_bounds = array<i64: 1, 16, 128>}, {transform_indices = @transform_1, window_bounds = array<i64: 1, 16, 16>}, {pipeline_mode = #tpu.pipeline_mode<synchronous>, transform_indices = @transform_2, window_bounds = array<i64: 5, 128, 128>}, {pipeline_mode = #tpu.pipeline_mode<synchronous>, transform_indices = @transform_3, window_bounds = array<i64: 5, 1, 128>}, {pipeline_mode = #tpu.pipeline_mode<synchronous>, transform_indices = @transform_4, window_bounds = array<i64: 5, 1, 128>}, {transform_indices = @transform_5, window_bounds = array<i64: 1, 16, 128>}, {transform_indices = @transform_6, window_bounds = array<i64: 1, 16, 16>}]} {
    %c0 = arith.constant 0 : index
    %c0_0 = arith.constant 0 : index
    %c0_1 = arith.constant 0 : index
    %0 = vector.load %arg2[%c0, %c0_0, %c0_1] : memref<1x16x16xi8, #tpu.memory_space<vmem>>, vector<1x16x16xi8>
    %1 = vector.shape_cast %0 : vector<1x16x16xi8> to vector<16x16xi8>
    %2 = arith.sitofp %1 : vector<16x16xi8> to vector<16x16xf32>
    %cst = arith.constant 1.000000e+00 : f32
    %3 = vector.broadcast %cst : f32 to vector<16x16xf32>
    %4 = arith.subf %2, %3 : vector<16x16xf32>
    %cst_2 = arith.constant 1.000000e+30 : f32
    %5 = vector.broadcast %cst_2 : f32 to vector<16x16xf32>
    %6 = arith.mulf %4, %5 : vector<16x16xf32>
    %7 = tpu.iota {dimensions = array<i32: 1>} : vector<16x128xi32>
    %c0_3 = arith.constant 0 : index
    %c0_4 = arith.constant 0 : index
    %c0_5 = arith.constant 0 : index
    %8 = vector.load %arg1[%c0_3, %c0_4, %c0_5] : memref<1x16x128xbf16, #tpu.memory_space<vmem>>, vector<1x16x128xbf16>
    %9 = vector.shape_cast %8 : vector<1x16x128xbf16> to vector<16x128xbf16>
    %c0_6 = arith.constant 0 : index
    %c0_7 = arith.constant 0 : index
    %c0_8 = arith.constant 0 : index
    %10 = vector.load %arg3[%c0_6, %c0_7, %c0_8] : memref<5x128x128xbf16, #tpu.memory_space<vmem>>, vector<1x128x128xbf16>
    %11 = vector.shape_cast %10 : vector<1x128x128xbf16> to vector<128x128xbf16>
    %cst_9 = arith.constant dense<0.000000e+00> : vector<16x128xf32>
    %12 = tpu.matmul %9, %11, %cst_9 {dimension_numbers = #tpu.dot_dimension_numbers<[1], [0], [0], [1], [0, 0, 1, 1], [], []>} : vector<16x128xbf16>, vector<128x128xbf16>, vector<16x128xf32> -> vector<16x128xf32>
    %13 = vector.extract_strided_slice %12 {offsets = [0, 127], sizes = [16, 1], strides = [1, 1]} : vector<16x128xf32> to vector<16x1xf32>
    %c0_10 = arith.constant 0 : index
    %c0_11 = arith.constant 0 : index
    %c0_12 = arith.constant 0 : index
    %14 = vector.load %arg4[%c0_10, %c0_11, %c0_12] : memref<5x1x128xbf16, #tpu.memory_space<vmem>>, vector<1x1x128xbf16>
    %15 = vector.shape_cast %14 : vector<1x1x128xbf16> to vector<1x128xbf16>
    %cst_13 = arith.constant dense<0.000000e+00> : vector<1x16xf32>
    %16 = tpu.matmul %15, %9, %cst_13 {dimension_numbers = #tpu.dot_dimension_numbers<[1], [1], [0], [0], [0, 0, 1, 0], [], []>} : vector<1x128xbf16>, vector<16x128xbf16>, vector<1x16xf32> -> vector<1x16xf32>
    %17 = vector.broadcast %13 : vector<16x1xf32> to vector<16x16xf32>
    %18 = vector.broadcast %16 : vector<1x16xf32> to vector<16x16xf32>
    %19 = arith.addf %17, %18 : vector<16x16xf32>
    %cst_14 = arith.constant 0.000000e+00 : f32
    %20 = vector.broadcast %cst_14 : f32 to vector<16x16xf32>
    %21 = arith.cmpf ogt, %19, %20 : vector<16x16xf32>
    %cst_15 = arith.constant 2.000000e-01 : f32
    %22 = vector.broadcast %cst_15 : f32 to vector<16x16xf32>
    %23 = arith.mulf %22, %19 : vector<16x16xf32>
    %24 = arith.select %21, %19, %23 : vector<16x16xi1>, vector<16x16xf32>
    %25 = arith.addf %24, %6 : vector<16x16xf32>
    %cst_16 = arith.constant dense<0xFF800000> : vector<16xf32>
    %26 = vector.multi_reduction <maximumf>, %25, %cst_16 [1] : vector<16x16xf32> to vector<16xf32>
    %27 = vector.shape_cast %26 : vector<16xf32> to vector<16x1xf32>
    %28 = vector.broadcast %27 : vector<16x1xf32> to vector<16x16xf32>
    %29 = arith.subf %25, %28 : vector<16x16xf32>
    %30 = math.exp %29 : vector<16x16xf32>
    %c126_i32 = arith.constant 126 : i32
    %31 = vector.broadcast %c126_i32 : i32 to vector<16x128xi32>
    %32 = arith.cmpi eq, %7, %31 : vector<16x128xi32>
    %cst_17 = arith.constant 1.000000e+00 : f32
    %33 = vector.broadcast %cst_17 : f32 to vector<16x128xf32>
    %34 = arith.select %32, %33, %12 : vector<16x128xi1>, vector<16x128xf32>
    %35 = arith.truncf %30 : vector<16x16xf32> to vector<16x16xbf16>
    %36 = arith.truncf %34 : vector<16x128xf32> to vector<16x128xbf16>
    %cst_18 = arith.constant dense<0.000000e+00> : vector<16x128xf32>
    %37 = tpu.matmul %35, %36, %cst_18 {dimension_numbers = #tpu.dot_dimension_numbers<[1], [0], [0], [1], [0, 0, 1, 1], [], []>} : vector<16x16xbf16>, vector<16x128xbf16>, vector<16x128xf32> -> vector<16x128xf32>
    %38 = vector.extract_strided_slice %37 {offsets = [0, 126], sizes = [16, 1], strides = [1, 1]} : vector<16x128xf32> to vector<16x1xf32>
    %39 = tpu.reciprocal %38 {approx = true} : vector<16x1xf32> -> vector<16x1xf32>
    %40 = vector.broadcast %39 : vector<16x1xf32> to vector<16x128xf32>
    %41 = arith.mulf %37, %40 : vector<16x128xf32>
    %c0_19 = arith.constant 0 : index
    %c0_20 = arith.constant 0 : index
    %c0_21 = arith.constant 0 : index
    %42 = vector.load %arg5[%c0_19, %c0_20, %c0_21] : memref<5x1x128xf32, #tpu.memory_space<vmem>>, vector<1x1x128xf32>
    %43 = vector.shape_cast %42 : vector<1x1x128xf32> to vector<1x128xf32>
    %44 = vector.broadcast %43 : vector<1x128xf32> to vector<16x128xf32>
    %45 = arith.addf %41, %44 : vector<16x128xf32>
    %cst_22 = arith.constant 0.000000e+00 : f32
    %46 = vector.broadcast %cst_22 : f32 to vector<16x128xf32>
    %47 = arith.maximumf %45, %46 : vector<16x128xf32>
    %48 = arith.truncf %47 : vector<16x128xf32> to vector<16x128xbf16>
    %c1 = arith.constant 1 : index
    %c0_23 = arith.constant 0 : index
    %c0_24 = arith.constant 0 : index
    %49 = vector.load %arg3[%c1, %c0_23, %c0_24] : memref<5x128x128xbf16, #tpu.memory_space<vmem>>, vector<1x128x128xbf16>
    %50 = vector.shape_cast %49 : vector<1x128x128xbf16> to vector<128x128xbf16>
    %cst_25 = arith.constant dense<0.000000e+00> : vector<16x128xf32>
    %51 = tpu.matmul %48, %50, %cst_25 {dimension_numbers = #tpu.dot_dimension_numbers<[1], [0], [0], [1], [0, 0, 1, 1], [], []>} : vector<16x128xbf16>, vector<128x128xbf16>, vector<16x128xf32> -> vector<16x128xf32>
    %52 = vector.extract_strided_slice %51 {offsets = [0, 127], sizes = [16, 1], strides = [1, 1]} : vector<16x128xf32> to vector<16x1xf32>
    %c1_26 = arith.constant 1 : index
    %c0_27 = arith.constant 0 : index
    %c0_28 = arith.constant 0 : index
    %53 = vector.load %arg4[%c1_26, %c0_27, %c0_28] : memref<5x1x128xbf16, #tpu.memory_space<vmem>>, vector<1x1x128xbf16>
    %54 = vector.shape_cast %53 : vector<1x1x128xbf16> to vector<1x128xbf16>
    %cst_29 = arith.constant dense<0.000000e+00> : vector<1x16xf32>
    %55 = tpu.matmul %54, %48, %cst_29 {dimension_numbers = #tpu.dot_dimension_numbers<[1], [1], [0], [0], [0, 0, 1, 0], [], []>} : vector<1x128xbf16>, vector<16x128xbf16>, vector<1x16xf32> -> vector<1x16xf32>
    %56 = vector.broadcast %52 : vector<16x1xf32> to vector<16x16xf32>
    %57 = vector.broadcast %55 : vector<1x16xf32> to vector<16x16xf32>
    %58 = arith.addf %56, %57 : vector<16x16xf32>
    %cst_30 = arith.constant 0.000000e+00 : f32
    %59 = vector.broadcast %cst_30 : f32 to vector<16x16xf32>
    %60 = arith.cmpf ogt, %58, %59 : vector<16x16xf32>
    %cst_31 = arith.constant 2.000000e-01 : f32
    %61 = vector.broadcast %cst_31 : f32 to vector<16x16xf32>
    %62 = arith.mulf %61, %58 : vector<16x16xf32>
    %63 = arith.select %60, %58, %62 : vector<16x16xi1>, vector<16x16xf32>
    %64 = arith.addf %63, %6 : vector<16x16xf32>
    %cst_32 = arith.constant dense<0xFF800000> : vector<16xf32>
    %65 = vector.multi_reduction <maximumf>, %64, %cst_32 [1] : vector<16x16xf32> to vector<16xf32>
    %66 = vector.shape_cast %65 : vector<16xf32> to vector<16x1xf32>
    %67 = vector.broadcast %66 : vector<16x1xf32> to vector<16x16xf32>
    %68 = arith.subf %64, %67 : vector<16x16xf32>
    %69 = math.exp %68 : vector<16x16xf32>
    %c126_i32_33 = arith.constant 126 : i32
    %70 = vector.broadcast %c126_i32_33 : i32 to vector<16x128xi32>
    %71 = arith.cmpi eq, %7, %70 : vector<16x128xi32>
    %cst_34 = arith.constant 1.000000e+00 : f32
    %72 = vector.broadcast %cst_34 : f32 to vector<16x128xf32>
    %73 = arith.select %71, %72, %51 : vector<16x128xi1>, vector<16x128xf32>
    %74 = arith.truncf %69 : vector<16x16xf32> to vector<16x16xbf16>
    %75 = arith.truncf %73 : vector<16x128xf32> to vector<16x128xbf16>
    %cst_35 = arith.constant dense<0.000000e+00> : vector<16x128xf32>
    %76 = tpu.matmul %74, %75, %cst_35 {dimension_numbers = #tpu.dot_dimension_numbers<[1], [0], [0], [1], [0, 0, 1, 1], [], []>} : vector<16x16xbf16>, vector<16x128xbf16>, vector<16x128xf32> -> vector<16x128xf32>
    %77 = vector.extract_strided_slice %76 {offsets = [0, 126], sizes = [16, 1], strides = [1, 1]} : vector<16x128xf32> to vector<16x1xf32>
    %78 = tpu.reciprocal %77 {approx = true} : vector<16x1xf32> -> vector<16x1xf32>
    %79 = vector.broadcast %78 : vector<16x1xf32> to vector<16x128xf32>
    %80 = arith.mulf %76, %79 : vector<16x128xf32>
    %c1_36 = arith.constant 1 : index
    %c0_37 = arith.constant 0 : index
    %c0_38 = arith.constant 0 : index
    %81 = vector.load %arg5[%c1_36, %c0_37, %c0_38] : memref<5x1x128xf32, #tpu.memory_space<vmem>>, vector<1x1x128xf32>
    %82 = vector.shape_cast %81 : vector<1x1x128xf32> to vector<1x128xf32>
    %83 = vector.broadcast %82 : vector<1x128xf32> to vector<16x128xf32>
    %84 = arith.addf %80, %83 : vector<16x128xf32>
    %85 = arith.truncf %84 : vector<16x128xf32> to vector<16x128xbf16>
    %c2 = arith.constant 2 : index
    %c0_39 = arith.constant 0 : index
    %c0_40 = arith.constant 0 : index
    %86 = vector.load %arg3[%c2, %c0_39, %c0_40] : memref<5x128x128xbf16, #tpu.memory_space<vmem>>, vector<1x128x128xbf16>
    %87 = vector.shape_cast %86 : vector<1x128x128xbf16> to vector<128x128xbf16>
    %cst_41 = arith.constant dense<0.000000e+00> : vector<16x128xf32>
    %88 = tpu.matmul %85, %87, %cst_41 {dimension_numbers = #tpu.dot_dimension_numbers<[1], [0], [0], [1], [0, 0, 1, 1], [], []>} : vector<16x128xbf16>, vector<128x128xbf16>, vector<16x128xf32> -> vector<16x128xf32>
    %89 = vector.extract_strided_slice %88 {offsets = [0, 127], sizes = [16, 1], strides = [1, 1]} : vector<16x128xf32> to vector<16x1xf32>
    %c2_42 = arith.constant 2 : index
    %c0_43 = arith.constant 0 : index
    %c0_44 = arith.constant 0 : index
    %90 = vector.load %arg4[%c2_42, %c0_43, %c0_44] : memref<5x1x128xbf16, #tpu.memory_space<vmem>>, vector<1x1x128xbf16>
    %91 = vector.shape_cast %90 : vector<1x1x128xbf16> to vector<1x128xbf16>
    %cst_45 = arith.constant dense<0.000000e+00> : vector<1x16xf32>
    %92 = tpu.matmul %91, %85, %cst_45 {dimension_numbers = #tpu.dot_dimension_numbers<[1], [1], [0], [0], [0, 0, 1, 0], [], []>} : vector<1x128xbf16>, vector<16x128xbf16>, vector<1x16xf32> -> vector<1x16xf32>
    %93 = vector.broadcast %89 : vector<16x1xf32> to vector<16x16xf32>
    %94 = vector.broadcast %92 : vector<1x16xf32> to vector<16x16xf32>
    %95 = arith.addf %93, %94 : vector<16x16xf32>
    %cst_46 = arith.constant 0.000000e+00 : f32
    %96 = vector.broadcast %cst_46 : f32 to vector<16x16xf32>
    %97 = arith.cmpf ogt, %95, %96 : vector<16x16xf32>
    %cst_47 = arith.constant 2.000000e-01 : f32
    %98 = vector.broadcast %cst_47 : f32 to vector<16x16xf32>
    %99 = arith.mulf %98, %95 : vector<16x16xf32>
    %100 = arith.select %97, %95, %99 : vector<16x16xi1>, vector<16x16xf32>
    %101 = arith.addf %100, %6 : vector<16x16xf32>
    %cst_48 = arith.constant dense<0xFF800000> : vector<16xf32>
    %102 = vector.multi_reduction <maximumf>, %101, %cst_48 [1] : vector<16x16xf32> to vector<16xf32>
    %103 = vector.shape_cast %102 : vector<16xf32> to vector<16x1xf32>
    %104 = vector.broadcast %103 : vector<16x1xf32> to vector<16x16xf32>
    %105 = arith.subf %101, %104 : vector<16x16xf32>
    %106 = math.exp %105 : vector<16x16xf32>
    %c126_i32_49 = arith.constant 126 : i32
    %107 = vector.broadcast %c126_i32_49 : i32 to vector<16x128xi32>
    %108 = arith.cmpi eq, %7, %107 : vector<16x128xi32>
    %cst_50 = arith.constant 1.000000e+00 : f32
    %109 = vector.broadcast %cst_50 : f32 to vector<16x128xf32>
    %110 = arith.select %108, %109, %88 : vector<16x128xi1>, vector<16x128xf32>
    %111 = arith.truncf %106 : vector<16x16xf32> to vector<16x16xbf16>
    %112 = arith.truncf %110 : vector<16x128xf32> to vector<16x128xbf16>
    %cst_51 = arith.constant dense<0.000000e+00> : vector<16x128xf32>
    %113 = tpu.matmul %111, %112, %cst_51 {dimension_numbers = #tpu.dot_dimension_numbers<[1], [0], [0], [1], [0, 0, 1, 1], [], []>} : vector<16x16xbf16>, vector<16x128xbf16>, vector<16x128xf32> -> vector<16x128xf32>
    %114 = vector.extract_strided_slice %113 {offsets = [0, 126], sizes = [16, 1], strides = [1, 1]} : vector<16x128xf32> to vector<16x1xf32>
    %115 = tpu.reciprocal %114 {approx = true} : vector<16x1xf32> -> vector<16x1xf32>
    %116 = vector.broadcast %115 : vector<16x1xf32> to vector<16x128xf32>
    %117 = arith.mulf %113, %116 : vector<16x128xf32>
    %c2_52 = arith.constant 2 : index
    %c0_53 = arith.constant 0 : index
    %c0_54 = arith.constant 0 : index
    %118 = vector.load %arg5[%c2_52, %c0_53, %c0_54] : memref<5x1x128xf32, #tpu.memory_space<vmem>>, vector<1x1x128xf32>
    %119 = vector.shape_cast %118 : vector<1x1x128xf32> to vector<1x128xf32>
    %120 = vector.broadcast %119 : vector<1x128xf32> to vector<16x128xf32>
    %121 = arith.addf %117, %120 : vector<16x128xf32>
    %cst_55 = arith.constant 0.000000e+00 : f32
    %122 = vector.broadcast %cst_55 : f32 to vector<16x128xf32>
    %123 = arith.maximumf %121, %122 : vector<16x128xf32>
    %124 = arith.truncf %123 : vector<16x128xf32> to vector<16x128xbf16>
    %c3 = arith.constant 3 : index
    %c0_56 = arith.constant 0 : index
    %c0_57 = arith.constant 0 : index
    %125 = vector.load %arg3[%c3, %c0_56, %c0_57] : memref<5x128x128xbf16, #tpu.memory_space<vmem>>, vector<1x128x128xbf16>
    %126 = vector.shape_cast %125 : vector<1x128x128xbf16> to vector<128x128xbf16>
    %cst_58 = arith.constant dense<0.000000e+00> : vector<16x128xf32>
    %127 = tpu.matmul %124, %126, %cst_58 {dimension_numbers = #tpu.dot_dimension_numbers<[1], [0], [0], [1], [0, 0, 1, 1], [], []>} : vector<16x128xbf16>, vector<128x128xbf16>, vector<16x128xf32> -> vector<16x128xf32>
    %128 = vector.extract_strided_slice %127 {offsets = [0, 127], sizes = [16, 1], strides = [1, 1]} : vector<16x128xf32> to vector<16x1xf32>
    %c3_59 = arith.constant 3 : index
    %c0_60 = arith.constant 0 : index
    %c0_61 = arith.constant 0 : index
    %129 = vector.load %arg4[%c3_59, %c0_60, %c0_61] : memref<5x1x128xbf16, #tpu.memory_space<vmem>>, vector<1x1x128xbf16>
    %130 = vector.shape_cast %129 : vector<1x1x128xbf16> to vector<1x128xbf16>
    %cst_62 = arith.constant dense<0.000000e+00> : vector<1x16xf32>
    %131 = tpu.matmul %130, %124, %cst_62 {dimension_numbers = #tpu.dot_dimension_numbers<[1], [1], [0], [0], [0, 0, 1, 0], [], []>} : vector<1x128xbf16>, vector<16x128xbf16>, vector<1x16xf32> -> vector<1x16xf32>
    %132 = vector.broadcast %128 : vector<16x1xf32> to vector<16x16xf32>
    %133 = vector.broadcast %131 : vector<1x16xf32> to vector<16x16xf32>
    %134 = arith.addf %132, %133 : vector<16x16xf32>
    %cst_63 = arith.constant 0.000000e+00 : f32
    %135 = vector.broadcast %cst_63 : f32 to vector<16x16xf32>
    %136 = arith.cmpf ogt, %134, %135 : vector<16x16xf32>
    %cst_64 = arith.constant 2.000000e-01 : f32
    %137 = vector.broadcast %cst_64 : f32 to vector<16x16xf32>
    %138 = arith.mulf %137, %134 : vector<16x16xf32>
    %139 = arith.select %136, %134, %138 : vector<16x16xi1>, vector<16x16xf32>
    %140 = arith.addf %139, %6 : vector<16x16xf32>
    %cst_65 = arith.constant dense<0xFF800000> : vector<16xf32>
    %141 = vector.multi_reduction <maximumf>, %140, %cst_65 [1] : vector<16x16xf32> to vector<16xf32>
    %142 = vector.shape_cast %141 : vector<16xf32> to vector<16x1xf32>
    %143 = vector.broadcast %142 : vector<16x1xf32> to vector<16x16xf32>
    %144 = arith.subf %140, %143 : vector<16x16xf32>
    %145 = math.exp %144 : vector<16x16xf32>
    %c126_i32_66 = arith.constant 126 : i32
    %146 = vector.broadcast %c126_i32_66 : i32 to vector<16x128xi32>
    %147 = arith.cmpi eq, %7, %146 : vector<16x128xi32>
    %cst_67 = arith.constant 1.000000e+00 : f32
    %148 = vector.broadcast %cst_67 : f32 to vector<16x128xf32>
    %149 = arith.select %147, %148, %127 : vector<16x128xi1>, vector<16x128xf32>
    %150 = arith.truncf %145 : vector<16x16xf32> to vector<16x16xbf16>
    %151 = arith.truncf %149 : vector<16x128xf32> to vector<16x128xbf16>
    %cst_68 = arith.constant dense<0.000000e+00> : vector<16x128xf32>
    %152 = tpu.matmul %150, %151, %cst_68 {dimension_numbers = #tpu.dot_dimension_numbers<[1], [0], [0], [1], [0, 0, 1, 1], [], []>} : vector<16x16xbf16>, vector<16x128xbf16>, vector<16x128xf32> -> vector<16x128xf32>
    %153 = vector.extract_strided_slice %152 {offsets = [0, 126], sizes = [16, 1], strides = [1, 1]} : vector<16x128xf32> to vector<16x1xf32>
    %154 = tpu.reciprocal %153 {approx = true} : vector<16x1xf32> -> vector<16x1xf32>
    %155 = vector.broadcast %154 : vector<16x1xf32> to vector<16x128xf32>
    %156 = arith.mulf %152, %155 : vector<16x128xf32>
    %c3_69 = arith.constant 3 : index
    %c0_70 = arith.constant 0 : index
    %c0_71 = arith.constant 0 : index
    %157 = vector.load %arg5[%c3_69, %c0_70, %c0_71] : memref<5x1x128xf32, #tpu.memory_space<vmem>>, vector<1x1x128xf32>
    %158 = vector.shape_cast %157 : vector<1x1x128xf32> to vector<1x128xf32>
    %159 = vector.broadcast %158 : vector<1x128xf32> to vector<16x128xf32>
    %160 = arith.addf %156, %159 : vector<16x128xf32>
    %c0_72 = arith.constant 0 : index
    %c0_73 = arith.constant 0 : index
    %c0_74 = arith.constant 0 : index
    %161 = vector.load %arg6[%c0_72, %c0_73, %c0_74] : memref<1x16x128xf32, #tpu.memory_space<vmem>>, vector<1x16x128xf32>
    %162 = vector.shape_cast %161 : vector<1x16x128xf32> to vector<16x128xf32>
    %163 = vector.shape_cast %160 : vector<16x128xf32> to vector<1x16x128xf32>
    tpu.vector_store %arg6[%c0_72, %c0_73, %c0_74], %163 {strides = array<i32>} : memref<1x16x128xf32, #tpu.memory_space<vmem>>, vector<1x16x128xf32>,
    %c4 = arith.constant 4 : index
    %c0_75 = arith.constant 0 : index
    %c0_76 = arith.constant 0 : index
    %164 = vector.load %arg3[%c4, %c0_75, %c0_76] : memref<5x128x128xbf16, #tpu.memory_space<vmem>>, vector<1x128x128xbf16>
    %165 = vector.shape_cast %164 : vector<1x128x128xbf16> to vector<128x128xbf16>
    %cst_77 = arith.constant dense<0.000000e+00> : vector<16x128xf32>
    %166 = tpu.matmul %85, %165, %cst_77 {dimension_numbers = #tpu.dot_dimension_numbers<[1], [0], [0], [1], [0, 0, 1, 1], [], []>} : vector<16x128xbf16>, vector<128x128xbf16>, vector<16x128xf32> -> vector<16x128xf32>
    %167 = vector.extract_strided_slice %166 {offsets = [0, 127], sizes = [16, 1], strides = [1, 1]} : vector<16x128xf32> to vector<16x1xf32>
    %c4_78 = arith.constant 4 : index
    %c0_79 = arith.constant 0 : index
    %c0_80 = arith.constant 0 : index
    %168 = vector.load %arg4[%c4_78, %c0_79, %c0_80] : memref<5x1x128xbf16, #tpu.memory_space<vmem>>, vector<1x1x128xbf16>
    %169 = vector.shape_cast %168 : vector<1x1x128xbf16> to vector<1x128xbf16>
    %cst_81 = arith.constant dense<0.000000e+00> : vector<1x16xf32>
    %170 = tpu.matmul %169, %85, %cst_81 {dimension_numbers = #tpu.dot_dimension_numbers<[1], [1], [0], [0], [0, 0, 1, 0], [], []>} : vector<1x128xbf16>, vector<16x128xbf16>, vector<1x16xf32> -> vector<1x16xf32>
    %171 = vector.broadcast %167 : vector<16x1xf32> to vector<16x16xf32>
    %172 = vector.broadcast %170 : vector<1x16xf32> to vector<16x16xf32>
    %173 = arith.addf %171, %172 : vector<16x16xf32>
    %cst_82 = arith.constant 0.000000e+00 : f32
    %174 = vector.broadcast %cst_82 : f32 to vector<16x16xf32>
    %175 = arith.cmpf ogt, %173, %174 : vector<16x16xf32>
    %cst_83 = arith.constant 2.000000e-01 : f32
    %176 = vector.broadcast %cst_83 : f32 to vector<16x16xf32>
    %177 = arith.mulf %176, %173 : vector<16x16xf32>
    %178 = arith.select %175, %173, %177 : vector<16x16xi1>, vector<16x16xf32>
    %179 = arith.addf %178, %6 : vector<16x16xf32>
    %cst_84 = arith.constant dense<0xFF800000> : vector<16xf32>
    %180 = vector.multi_reduction <maximumf>, %179, %cst_84 [1] : vector<16x16xf32> to vector<16xf32>
    %181 = vector.shape_cast %180 : vector<16xf32> to vector<16x1xf32>
    %182 = vector.broadcast %181 : vector<16x1xf32> to vector<16x16xf32>
    %183 = arith.subf %179, %182 : vector<16x16xf32>
    %184 = math.exp %183 : vector<16x16xf32>
    %c126_i32_85 = arith.constant 126 : i32
    %185 = vector.broadcast %c126_i32_85 : i32 to vector<16x128xi32>
    %186 = arith.cmpi eq, %7, %185 : vector<16x128xi32>
    %cst_86 = arith.constant 1.000000e+00 : f32
    %187 = vector.broadcast %cst_86 : f32 to vector<16x128xf32>
    %188 = arith.select %186, %187, %166 : vector<16x128xi1>, vector<16x128xf32>
    %189 = arith.truncf %184 : vector<16x16xf32> to vector<16x16xbf16>
    %190 = arith.truncf %188 : vector<16x128xf32> to vector<16x128xbf16>
    %cst_87 = arith.constant dense<0.000000e+00> : vector<16x128xf32>
    %191 = tpu.matmul %189, %190, %cst_87 {dimension_numbers = #tpu.dot_dimension_numbers<[1], [0], [0], [1], [0, 0, 1, 1], [], []>} : vector<16x16xbf16>, vector<16x128xbf16>, vector<16x128xf32> -> vector<16x128xf32>
    %192 = vector.extract_strided_slice %191 {offsets = [0, 126], sizes = [16, 1], strides = [1, 1]} : vector<16x128xf32> to vector<16x1xf32>
    %193 = tpu.reciprocal %192 {approx = true} : vector<16x1xf32> -> vector<16x1xf32>
    %194 = vector.broadcast %193 : vector<16x1xf32> to vector<16x128xf32>
    %195 = arith.mulf %191, %194 : vector<16x128xf32>
    %c4_88 = arith.constant 4 : index
    %c0_89 = arith.constant 0 : index
    %c0_90 = arith.constant 0 : index
    %196 = vector.load %arg5[%c4_88, %c0_89, %c0_90] : memref<5x1x128xf32, #tpu.memory_space<vmem>>, vector<1x1x128xf32>
    %197 = vector.shape_cast %196 : vector<1x1x128xf32> to vector<1x128xf32>
    %198 = vector.broadcast %197 : vector<1x128xf32> to vector<16x128xf32>
    %199 = arith.addf %195, %198 : vector<16x128xf32>
    %c126_i32_91 = arith.constant 126 : i32
    %200 = vector.broadcast %c126_i32_91 : i32 to vector<16x128xi32>
    %201 = arith.cmpi sge, %7, %200 : vector<16x128xi32>
    %cst_92 = arith.constant 0.000000e+00 : f32
    %202 = vector.broadcast %cst_92 : f32 to vector<16x128xf32>
    %203 = arith.select %201, %202, %199 : vector<16x128xi1>, vector<16x128xf32>
    %204 = arith.truncf %203 : vector<16x128xf32> to vector<16x128xbf16>
    %cst_93 = arith.constant dense<0.000000e+00> : vector<16x16xf32>
    %205 = tpu.matmul %204, %204, %cst_93 {dimension_numbers = #tpu.dot_dimension_numbers<[1], [1], [0], [0], [0, 0, 1, 0], [], []>} : vector<16x128xbf16>, vector<16x128xbf16>, vector<16x16xf32> -> vector<16x16xf32>
    %c0_94 = arith.constant 0 : index
    %c0_95 = arith.constant 0 : index
    %c0_96 = arith.constant 0 : index
    %206 = vector.load %arg7[%c0_94, %c0_95, %c0_96] : memref<1x16x16xf32, #tpu.memory_space<vmem>>, vector<1x16x16xf32>
    %207 = vector.shape_cast %206 : vector<1x16x16xf32> to vector<16x16xf32>
    %208 = vector.shape_cast %205 : vector<16x16xf32> to vector<1x16x16xf32>
    tpu.vector_store %arg7[%c0_94, %c0_95, %c0_96], %208 {strides = array<i32>} : memref<1x16x16xf32, #tpu.memory_space<vmem>>, vector<1x16x16xf32>,
    return
  }
  func.func @transform_0(%arg0: i32) -> (i32, i32, i32) {
    %c0_i32 = arith.constant 0 : i32
    %c0_i32_0 = arith.constant 0 : i32
    %c0_i32_1 = arith.constant 0 : i32
    return %arg0, %c0_i32, %c0_i32_0 : i32, i32, i32
  }
  func.func @transform_1(%arg0: i32) -> (i32, i32, i32) {
    %c0_i32 = arith.constant 0 : i32
    %c0_i32_0 = arith.constant 0 : i32
    %c0_i32_1 = arith.constant 0 : i32
    return %arg0, %c0_i32, %c0_i32_0 : i32, i32, i32
  }
  func.func @transform_2(%arg0: i32) -> (i32, i32, i32) {
    %c0_i32 = arith.constant 0 : i32
    %c0_i32_0 = arith.constant 0 : i32
    %c0_i32_1 = arith.constant 0 : i32
    %c0_i32_2 = arith.constant 0 : i32
    return %c0_i32, %c0_i32_0, %c0_i32_1 : i32, i32, i32
  }
  func.func @transform_3(%arg0: i32) -> (i32, i32, i32) {
    %c0_i32 = arith.constant 0 : i32
    %c0_i32_0 = arith.constant 0 : i32
    %c0_i32_1 = arith.constant 0 : i32
    %c0_i32_2 = arith.constant 0 : i32
    return %c0_i32, %c0_i32_0, %c0_i32_1 : i32, i32, i32
  }
  func.func @transform_4(%arg0: i32) -> (i32, i32, i32) {
    %c0_i32 = arith.constant 0 : i32
    %c0_i32_0 = arith.constant 0 : i32
    %c0_i32_1 = arith.constant 0 : i32
    %c0_i32_2 = arith.constant 0 : i32
    return %c0_i32, %c0_i32_0, %c0_i32_1 : i32, i32, i32
  }
  func.func @transform_5(%arg0: i32) -> (i32, i32, i32) {
    %c0_i32 = arith.constant 0 : i32
    %c0_i32_0 = arith.constant 0 : i32
    %c0_i32_1 = arith.constant 0 : i32
    return %arg0, %c0_i32, %c0_i32_0 : i32, i32, i32
  }
  func.func @transform_6(%arg0: i32) -> (i32, i32, i32) {
    %c0_i32 = arith.constant 0 : i32
    %c0_i32_0 = arith.constant 0 : i32
    %c0_i32_1 = arith.constant 0 : i32
    return %arg0, %c0_i32, %c0_i32_0 : i32, i32, i32
  }
}

</mosaic_0001>

<llo_original>
// kernel: gae_forward.1
$region0: #{gae_forward.1}
  #allocation0 [shape = 'u32[]', space=smem, size = 0x4, offset = 0x4, fixed_abs, tag = 'smem constant byte address 0x4 - core index']
  #allocation1 [shape = 'u32[144,128]{1,0:T(1,128)}', space=vmem, size = 0x12000, scoped, tag = 'internal scratch']
  %s0 = inlined_call_operand.vmem [shape: bf16[2,16,128], index: 0, kind: input, shape index: {}]
  %s1 = inlined_call_operand.vmem [shape: s8[2,16,16], index: 1, kind: input, shape index: {}]
  %s2 = inlined_call_operand.vmem [shape: bf16[5,128,128], index: 2, kind: input, shape index: {}]
  %s3 = inlined_call_operand.vmem [shape: bf16[5,1,128], index: 3, kind: input, shape index: {}]
  %s4 = inlined_call_operand.vmem [shape: f32[5,1,128], index: 4, kind: input, shape index: {}]
  %s5 = inlined_call_operand.vmem [shape: f32[2,16,128], index: 5, kind: output, shape index: {0}]
  %s6 = inlined_call_operand.hbm [shape: f32[2,16,16], index: 6, kind: output, shape index: {1}]
  %7 = xla_tuple %s5, %s6
  %s8 = sld [smem:[#allocation0]]
  $region61: #{gae_forward.1} parent=0
    _
  %s10 = ssub.s32 1, %s8
  %s11 = scalar_select 0, %s10, %s8
  $region1: #{gae_forward.1} parent=0
    #allocation2 [shape = 'u8[16384]{0}', space=vmem, size = 0x4000, scoped, tag = 'output window, operand 1']
    #allocation3 [shape = 's32[2]{0}', space=sflag, size = 0x8, scoped, tag = 'scoped memory for gae_forward.1']
    %12 = vsyncpa [#allocation3], 0
    %s13 = scalar_lea.sflag [#allocation3], 1
    %14 = vsyncpa %s13, 0
    loop: start=0, step=1, limit=4
    $region2: #{gae_forward.1} parent=1 // loop_pre_header
      _
    $region3: #{gae_forward.1} parent=1 // loop_header
      %s16 = sphi 0, %s20
      %p17 = scmp.ge.s32.totalorder %s16, 4
      %s26 = sphi 0, %s28
      %s29 = sphi 0, %s26
      %s30 = sphi 0, %s29
      %s46 = sphi 0, %s30
      %s52 = sphi 0, %s54
      %s55 = sphi 0, %s52
      %s56 = sphi 0, %s55
      %s72 = sphi 0, %s56
      %s76 = sphi 0, %s76
      %s78 = sphi 0, %s76
      %s79 = sphi 0, %s78
      %s93 = sphi 0, %s79
      %s97 = sphi 0, %s97
      %s99 = sphi 0, %s97
      %s100 = sphi 0, %s99
      %s114 = sphi 0, %s100
      %s118 = sphi 0, %s118
      %s120 = sphi 0, %s118
      %s121 = sphi 0, %s120
      %s135 = sphi 0, %s121
      %s141 = sphi 0, %s143
      %s144 = sphi 0, %s141
      %s145 = sphi 0, %s144
      %s161 = sphi 0, %s145
      %s167 = sphi 0, %s169
      %s170 = sphi 0, %s167
      %s171 = sphi 0, %s170
      %s187 = sphi 0, %s171
    $region4: #{gae_forward.1} parent=1 // loop_header_branch
      %19 = sbr.rel (%p17) target = $region8
    $region5: #{gae_forward.1} parent=1 // loop_body
      %s21 = ssub.s32 %s16, 1
      %s22 = ssub.s32 %s16, 2
      %s23 = sadd.s32 %s16, 1
      %s24 = ssub.s32 %s16, %s23
      %p25 = scmp.eq.s32.totalorder %s24, 0
      %s27 = sadd.s32 %s26, 1
      %s28 = scalar_select %p25, %s26, %s27
      %p31 = pneg %p25
      %p32 = scmp.eq.s32.totalorder %s16, 1
      %p33 = por %p31, %p32
      %p34 = scmp.ne.s32.totalorder %s26, %s29
      %p35 = scmp.eq.s32.totalorder %s16, 0
      %p36 = por %p34, %p35
      %p37 = scmp.ne.s32.totalorder %s26, %s29
      %p38 = scmp.eq.s32.totalorder %s21, 1
      %p39 = por %p37, %p38
      %p40 = scmp.ne.s32.totalorder %s29, %s30
      %p41 = scmp.eq.s32.totalorder %s21, 0
      %p42 = por %p40, %p41
      %p43 = scmp.ne.s32.totalorder %s29, %s30
      %p44 = scmp.eq.s32.totalorder %s22, 1
      %p45 = por %p43, %p44
      %p47 = scmp.ne.s32.totalorder %s30, %s46
      %p48 = scmp.eq.s32.totalorder %s22, 0
      %p49 = por %p47, %p48
      %s50 = ssub.s32 %s16, %s23
      %p51 = scmp.eq.s32.totalorder %s50, 0
      %s53 = sadd.s32 %s52, 1
      %s54 = scalar_select %p51, %s52, %s53
      %p57 = pneg %p51
      %p58 = scmp.eq.s32.totalorder %s16, 1
      %p59 = por %p57, %p58
      %p60 = scmp.ne.s32.totalorder %s52, %s55
      %p61 = scmp.eq.s32.totalorder %s16, 0
      %p62 = por %p60, %p61
      %p63 = scmp.ne.s32.totalorder %s52, %s55
      %p64 = scmp.eq.s32.totalorder %s21, 1
      %p65 = por %p63, %p64
      %p66 = scmp.ne.s32.totalorder %s55, %s56
      %p67 = scmp.eq.s32.totalorder %s21, 0
      %p68 = por %p66, %p67
      %p69 = scmp.ne.s32.totalorder %s55, %s56
      %p70 = scmp.eq.s32.totalorder %s22, 1
      %p71 = por %p69, %p70
      %p73 = scmp.ne.s32.totalorder %s56, %s72
      %p74 = scmp.eq.s32.totalorder %s22, 0
      %p75 = por %p73, %p74
      %s77 = sadd.s32 %s76, 1
      %p80 = scmp.eq.s32.totalorder %s16, 1
      %p81 = scmp.ne.s32.totalorder %s76, %s78
      %p82 = scmp.eq.s32.totalorder %s16, 0
      %p83 = por %p81, %p82
      %p84 = scmp.ne.s32.totalorder %s76, %s78
      %p85 = scmp.eq.s32.totalorder %s21, 1
      %p86 = por %p84, %p85
      %p87 = scmp.ne.s32.totalorder %s78, %s79
      %p88 = scmp.eq.s32.totalorder %s21, 0
      %p89 = por %p87, %p88
      %p90 = scmp.ne.s32.totalorder %s78, %s79
      %p91 = scmp.eq.s32.totalorder %s22, 1
      %p92 = por %p90, %p91
      %p94 = scmp.ne.s32.totalorder %s79, %s93
      %p95 = scmp.eq.s32.totalorder %s22, 0
      %p96 = por %p94, %p95
      %s98 = sadd.s32 %s97, 1
      %p101 = scmp.eq.s32.totalorder %s16, 1
      %p102 = scmp.ne.s32.totalorder %s97, %s99
      %p103 = scmp.eq.s32.totalorder %s16, 0
      %p104 = por %p102, %p103
      %p105 = scmp.ne.s32.totalorder %s97, %s99
      %p106 = scmp.eq.s32.totalorder %s21, 1
      %p107 = por %p105, %p106
      %p108 = scmp.ne.s32.totalorder %s99, %s100
      %p109 = scmp.eq.s32.totalorder %s21, 0
      %p110 = por %p108, %p109
      %p111 = scmp.ne.s32.totalorder %s99, %s100
      %p112 = scmp.eq.s32.totalorder %s22, 1
      %p113 = por %p111, %p112
      %p115 = scmp.ne.s32.totalorder %s100, %s114
      %p116 = scmp.eq.s32.totalorder %s22, 0
      %p117 = por %p115, %p116
      %s119 = sadd.s32 %s118, 1
      %p122 = scmp.eq.s32.totalorder %s16, 1
      %p123 = scmp.ne.s32.totalorder %s118, %s120
      %p124 = scmp.eq.s32.totalorder %s16, 0
      %p125 = por %p123, %p124
      %p126 = scmp.ne.s32.totalorder %s118, %s120
      %p127 = scmp.eq.s32.totalorder %s21, 1
      %p128 = por %p126, %p127
      %p129 = scmp.ne.s32.totalorder %s120, %s121
      %p130 = scmp.eq.s32.totalorder %s21, 0
      %p131 = por %p129, %p130
      %p132 = scmp.ne.s32.totalorder %s120, %s121
      %p133 = scmp.eq.s32.totalorder %s22, 1
      %p134 = por %p132, %p133
      %p136 = scmp.ne.s32.totalorder %s121, %s135
      %p137 = scmp.eq.s32.totalorder %s22, 0
      %p138 = por %p136, %p137
      %s139 = ssub.s32 %s16, %s23
      %p140 = scmp.eq.s32.totalorder %s139, 0
      %s142 = sadd.s32 %s141, 1
      %s143 = scalar_select %p140, %s141, %s142
      %p146 = pneg %p140
      %p147 = scmp.eq.s32.totalorder %s16, 1
      %p148 = por %p146, %p147
      %p149 = scmp.ne.s32.totalorder %s141, %s144
      %p150 = scmp.eq.s32.totalorder %s16, 0
      %p151 = por %p149, %p150
      %p152 = scmp.ne.s32.totalorder %s141, %s144
      %p153 = scmp.eq.s32.totalorder %s21, 1
      %p154 = por %p152, %p153
      %p155 = scmp.ne.s32.totalorder %s144, %s145
      %p156 = scmp.eq.s32.totalorder %s21, 0
      %p157 = por %p155, %p156
      %p158 = scmp.ne.s32.totalorder %s144, %s145
      %p159 = scmp.eq.s32.totalorder %s22, 1
      %p160 = por %p158, %p159
      %p162 = scmp.ne.s32.totalorder %s145, %s161
      %p163 = scmp.eq.s32.totalorder %s22, 0
      %p164 = por %p162, %p163
      %s165 = ssub.s32 %s16, %s23
      %p166 = scmp.eq.s32.totalorder %s165, 0
      %s168 = sadd.s32 %s167, 1
      %s169 = scalar_select %p166, %s167, %s168
      %p172 = pneg %p166
      %p173 = scmp.eq.s32.totalorder %s16, 1
      %p174 = por %p172, %p173
      %p175 = scmp.ne.s32.totalorder %s167, %s170
      %p176 = scmp.eq.s32.totalorder %s16, 0
      %p177 = por %p175, %p176
      %p178 = scmp.ne.s32.totalorder %s167, %s170
      %p179 = scmp.eq.s32.totalorder %s21, 1
      %p180 = por %p178, %p179
      %p181 = scmp.ne.s32.totalorder %s170, %s171
      %p182 = scmp.eq.s32.totalorder %s21, 0
      %p183 = por %p181, %p182
      %p184 = scmp.ne.s32.totalorder %s170, %s171
      %p185 = scmp.eq.s32.totalorder %s22, 1
      %p186 = por %p184, %p185
      %p188 = scmp.ne.s32.totalorder %s171, %s187
      %p189 = scmp.eq.s32.totalorder %s22, 0
      %p190 = por %p188, %p189
      %p191 = scmp.le.s32.totalorder 1, %s16
      %p192 = scmp.lt.s32.totalorder %s16, 3
      %p193 = pnand %p191, %p192
      %p194 = pneg %p193
      // Predicated region
      $region9: #{gae_forward.1} parent=5 // pred_check
        _
      $region10: #{gae_forward.1} parent=5 // pred_check_branch
        %196 = sbr.rel (%p193) target = $region12
      $region11: #{gae_forward.1} parent=5 // pred_region
        %s197 = ssub.s32 %s16, 1
        // Predicated region
        $region13: #{gae_forward.1} parent=11 // pred_check
          %p198 = pneg %p89
        $region14: #{gae_forward.1} parent=11 // pred_check_branch
          %200 = sbr.rel (%p198) target = $region16
        $region15: #{gae_forward.1} parent=11 // pred_region
          _
        $region16: #{gae_forward.1} parent=11 // pred_fallthru
          _
        // Predicated region
        $region17: #{gae_forward.1} parent=11 // pred_check
          %p201 = pneg %p110
        $region18: #{gae_forward.1} parent=11 // pred_check_branch
          %203 = sbr.rel (%p201) target = $region20
        $region19: #{gae_forward.1} parent=11 // pred_region
          _
        $region20: #{gae_forward.1} parent=11 // pred_fallthru
          _
        // Predicated region
        $region21: #{gae_forward.1} parent=11 // pred_check
          %p204 = pneg %p131
        $region22: #{gae_forward.1} parent=11 // pred_check_branch
          %206 = sbr.rel (%p204) target = $region24
        $region23: #{gae_forward.1} parent=11 // pred_region
          _
        $region24: #{gae_forward.1} parent=11 // pred_fallthru
          _
      $region12: #{gae_forward.1} parent=5 // pred_fallthru
        _
      %p207 = scmp.lt.s32.totalorder %s16, 2
      // Predicated region
      $region25: #{gae_forward.1} parent=5 // pred_check
        %p208 = pneg %p207
      $region26: #{gae_forward.1} parent=5 // pred_check_branch
        %210 = sbr.rel (%p208) target = $region28
      $region27: #{gae_forward.1} parent=5 // pred_region
        // Predicated region
        $region29: #{gae_forward.1} parent=27 // pred_check
          %p211 = pneg %p36
        $region30: #{gae_forward.1} parent=27 // pred_check_branch
          %213 = sbr.rel (%p211) target = $region32
        $region31: #{gae_forward.1} parent=27 // pred_region
          %p214 = scmp.lt.s32.totalorder %s16, 1
          %s215 = scalar_select %p214, %s16, 1
          %s216 = smul.addr %s215, 2
          %s217 = smul.addr %s216, 4
          %s218 = scalar_lea.vmem %s0, %s217
        $region32: #{gae_forward.1} parent=27 // pred_fallthru
          _
        // Predicated region
        $region33: #{gae_forward.1} parent=27 // pred_check
          %p219 = pneg %p62
        $region34: #{gae_forward.1} parent=27 // pred_check_branch
          %221 = sbr.rel (%p219) target = $region36
        $region35: #{gae_forward.1} parent=27 // pred_region
          %p222 = scmp.lt.s32.totalorder %s16, 1
          %s223 = scalar_select %p222, %s16, 1
          %s224 = smul.addr %s223, 2
          %s225 = smul.addr %s224, 2
          %s226 = scalar_lea.vmem %s1, %s225
        $region36: #{gae_forward.1} parent=27 // pred_fallthru
          _
      $region28: #{gae_forward.1} parent=5 // pred_fallthru
        _
      %p227 = scmp.le.s32.totalorder 1, %s16
      %p228 = scmp.lt.s32.totalorder %s16, 3
      %p229 = pnand %p227, %p228
      %p230 = pneg %p229
      // Predicated region
      $region37: #{gae_forward.1} parent=5 // pred_check
        _
      $region38: #{gae_forward.1} parent=5 // pred_check_branch
        %232 = sbr.rel (%p229) target = $region40
      $region39: #{gae_forward.1} parent=5 // pred_region
        %s233 = ssub.s32 %s16, 1
        %p234 = scmp.lt.s32.totalorder %s21, 1
        %s235 = scalar_select %p234, %s21, 1
        %s236 = smul.addr %s235, 2
        %s237 = smul.addr %s236, 4
        %s238 = scalar_lea.vmem %s0, %s237
        %p239 = pneg %p42
        %p240 = pneg %p39
        %p241 = scmp.lt.s32.totalorder %s21, 1
        %s242 = scalar_select %p241, %s21, 1
        %s243 = smul.addr %s242, 2
        %s244 = smul.addr %s243, 2
        %s245 = scalar_lea.vmem %s1, %s244
        %p246 = pneg %p68
        %p247 = pneg %p65
        %p248 = pneg %p89
        %p249 = pneg %p86
        %p250 = pneg %p110
        %p251 = pneg %p107
        %p252 = pneg %p131
        %p253 = pneg %p128
        %p254 = pneg %p157
        %p255 = pneg %p154
        %p256 = scmp.lt.s32.totalorder %s21, 1
        %s257 = scalar_select %p256, %s21, 1
        %s258 = smul.addr %s257, 2
        %s259 = smul.addr %s258, 8
        %s260 = scalar_lea.vmem %s5, %s259
        %p261 = pneg %p183
        %p262 = pneg %p180
        %s263 = sand.u32 %s170, 1
        %s264 = scalar_lea.sflag [#allocation3], %s263
        %s265 = sand.u32 %s170, 1
        %s266 = smul.addr %s265, 16
        %s267 = scalar_lea.vmem [#allocation2], %s266
        %p268 = scmp.lt.s32.totalorder %s21, 1
        %s269 = scalar_select %p268, %s21, 1
        %s270 = smul.addr %s269, 2
        %s271 = smul.addr %s270, 4
        %s272 = scalar_lea.vmem %s0, %s271
        %p273 = scmp.lt.s32.totalorder %s21, 1
        %s274 = scalar_select %p273, %s21, 1
        %s275 = smul.addr %s274, 2
        %s276 = smul.addr %s275, 2
        %s277 = scalar_lea.vmem %s1, %s276
        %p278 = scmp.lt.s32.totalorder %s21, 1
        %s279 = scalar_select %p278, %s21, 1
        %s280 = smul.addr %s279, 2
        %s281 = smul.addr %s280, 8
        %s282 = scalar_lea.vmem %s5, %s281
        %v284 = vld [vmem:[%s277] sm:$0x3]
        %v285 = vld [vmem:[%s277 + $0x2] sm:$0x3]
        %v286 = vunpack.c.0.s8 %v284
        %v287 = vunpack.c.0.s8 %v285
        %v288 = vcvt.s32.f32 %v286
        %v289 = vcvt.s32.f32 %v287
        %v290 = vsub.f32 %v288, 1.0
        %v291 = vsub.f32 %v289, 1.0
        %v292 = vmul.f32 %v290, 1e+30
        %v293 = vmul.f32 %v291, 1e+30
        %v294 = vlaneseq
        %v295 = vand.u32 %v294, 127
        %v296 = vld [vmem:[%s272] sm:$0xf]
        %v297 = vld [vmem:[%s272 + $0x4] sm:$0xf]
        %v298 = vld [vmem:[%s2] sm:$0xf]
        %v299 = vld [vmem:[%s2 + $0x4] sm:$0xf]
        %v300 = vld [vmem:[%s2 + $0x8] sm:$0xf]
        %v301 = vld [vmem:[%s2 + $0xc] sm:$0xf]
        %v302 = vld [vmem:[%s2 + $0x10] sm:$0xf]
        %v303 = vld [vmem:[%s2 + $0x14] sm:$0xf]
        %v304 = vld [vmem:[%s2 + $0x18] sm:$0xf]
        %v305 = vld [vmem:[%s2 + $0x1c] sm:$0xf]
        %v306 = vld [vmem:[%s2 + $0x20] sm:$0xf]
        %v307 = vld [vmem:[%s2 + $0x24] sm:$0xf]
        %v308 = vld [vmem:[%s2 + $0x28] sm:$0xf]
        %v309 = vld [vmem:[%s2 + $0x2c] sm:$0xf]
        %v310 = vld [vmem:[%s2 + $0x30] sm:$0xf]
        %v311 = vld [vmem:[%s2 + $0x34] sm:$0xf]
        %v312 = vld [vmem:[%s2 + $0x38] sm:$0xf]
        %v313 = vld [vmem:[%s2 + $0x3c] sm:$0xf]
        %v316 = vunpack.c.l.b16 %v296
        %v317 = vunpack.c.l.b16 %v297
        %v318 = vpack.c.b16 %v317, %v316
        %v336 = vunpack.c.l.b16 %v298
        %v337 = vunpack.c.l.b16 %v299
        %v338 = vunpack.c.l.b16 %v300
        %v339 = vunpack.c.l.b16 %v301
        %v340 = vunpack.c.l.b16 %v302
        %v341 = vunpack.c.l.b16 %v303
        %v342 = vunpack.c.l.b16 %v304
        %v343 = vunpack.c.l.b16 %v305
        %v344 = vunpack.c.l.b16 %v306
        %v345 = vunpack.c.l.b16 %v307
        %v346 = vunpack.c.l.b16 %v308
        %v347 = vunpack.c.l.b16 %v309
        %v348 = vunpack.c.l.b16 %v310
        %v349 = vunpack.c.l.b16 %v311
        %v350 = vunpack.c.l.b16 %v312
        %v351 = vunpack.c.l.b16 %v313
        %v352 = vpack.c.b16 %v337, %v336
        %v353 = vpack.c.b16 %v339, %v338
        %v354 = vpack.c.b16 %v341, %v340
        %v355 = vpack.c.b16 %v343, %v342
        %v356 = vpack.c.b16 %v345, %v344
        %v357 = vpack.c.b16 %v347, %v346
        %v358 = vpack.c.b16 %v349, %v348
        %v359 = vpack.c.b16 %v351, %v350
        %368 = vmatprep.subr.bf16.mxu0 0
        %369 = vmatpush1.bf16.msra.mxu0 %v352
        %370 = vmatprep.subr.bf16.mxu0 0
        %371 = vmatpush1.bf16.msra.mxu0 %v353
        %372 = vmatprep.subr.bf16.mxu0 0
        %373 = vmatpush1.bf16.msra.mxu0 %v354
        %374 = vmatprep.subr.bf16.mxu0 0
        %375 = vmatpush1.bf16.msra.mxu0 %v355
        %376 = vmatprep.subr.bf16.mxu0 0
        %377 = vmatpush1.bf16.msra.mxu0 %v356
        %378 = vmatprep.subr.bf16.mxu0 0
        %379 = vmatpush1.bf16.msra.mxu0 %v357
        %380 = vmatprep.subr.bf16.mxu0 0
        %381 = vmatpush1.bf16.msra.mxu0 %v358
        %382 = vmatprep.subr.bf16.mxu0 0
        %383 = vmatpush1.bf16.msra.mxu0 %v359
        %384 = vmatprep.subr.bf16.mxu0 0
        %385 = vmatpush1.bf16.msra.mxu0 0
        %386 = vmatprep.subr.bf16.mxu0 0
        %387 = vmatpush1.bf16.msra.mxu0 0
        %388 = vmatprep.subr.bf16.mxu0 0
        %389 = vmatpush1.bf16.msra.mxu0 0
        %390 = vmatprep.subr.bf16.mxu0 0
        %391 = vmatpush1.bf16.msra.mxu0 0
        %392 = vmatprep.subr.bf16.mxu0 0
        %393 = vmatpush1.bf16.msra.mxu0 0
        %394 = vmatprep.subr.bf16.mxu0 0
        %395 = vmatpush1.bf16.msra.mxu0 0
        %396 = vmatprep.subr.bf16.mxu0 0
        %397 = vmatpush1.bf16.msra.mxu0 0
        %398 = vmatprep.subr.bf16.mxu0 0
        %399 = vmatpush1.bf16.msra.mxu0 0
        %400 = vmatprep.mubr.bf16.mxu0 0
        %401 = vmatmul.mubr.bf16.gmra.mrb[0].mxu0 %v318
        %v402 = vpop.f32.mrb[0].mxu0
        %v403 = vadd.f32 0.0, %v402
        %v404 = vpop.f32.mrb[0].mxu0
        %v405 = vpop.f32.mrb[0].mxu0
        %v406 = vadd.f32 0.0, %v405
        %v407 = vpop.f32.mrb[0].mxu0
        %408 = vdwg.mxu0
        %v409 = vld [vmem:[%s3] sm:$0x1]
        %410 = vmatprep.subr.bf16.mxu0 0
        %411 = vmatpush1.bf16.xpose.msra.mxu0 %v318
        %412 = vmatprep.subr.bf16.mxu0 0
        %413 = vmatpush1.bf16.xpose.msra.mxu0 0
        %414 = vmatprep.subr.bf16.mxu0 0
        %415 = vmatpush1.bf16.xpose.msra.mxu0 0
        %416 = vmatprep.subr.bf16.mxu0 0
        %417 = vmatpush1.bf16.xpose.msra.mxu0 0
        %418 = vmatprep.subr.bf16.mxu0 0
        %419 = vmatpush1.bf16.xpose.msra.mxu0 0
        %420 = vmatprep.subr.bf16.mxu0 0
        %421 = vmatpush1.bf16.xpose.msra.mxu0 0
        %422 = vmatprep.subr.bf16.mxu0 0
        %423 = vmatpush1.bf16.xpose.msra.mxu0 0
        %424 = vmatprep.subr.bf16.mxu0 0
        %425 = vmatpush1.bf16.xpose.msra.mxu0 0
        %426 = vmatprep.subr.bf16.mxu0 0
        %427 = vmatpush1.bf16.xpose.msra.mxu0 0
        %428 = vmatprep.subr.bf16.mxu0 0
        %429 = vmatpush1.bf16.xpose.msra.mxu0 0
        %430 = vmatprep.subr.bf16.mxu0 0
        %431 = vmatpush1.bf16.xpose.msra.mxu0 0
        %432 = vmatprep.subr.bf16.mxu0 0
        %433 = vmatpush1.bf16.xpose.msra.mxu0 0
        %434 = vmatprep.subr.bf16.mxu0 0
        %435 = vmatpush1.bf16.xpose.msra.mxu0 0
        %436 = vmatprep.subr.bf16.mxu0 0
        %437 = vmatpush1.bf16.xpose.msra.mxu0 0
        %438 = vmatprep.subr.bf16.mxu0 0
        %439 = vmatpush1.bf16.xpose.msra.mxu0 0
        %440 = vmatprep.subr.bf16.mxu0 0
        %441 = vmatpush1.bf16.xpose.msra.mxu0 0
        %442 = vmatprep.mubr.bf16.mxu0 0
        %443 = vmatmul.mubr.bf16.gmra.mrb[0].mxu0 %v409
        %v444 = vpop.f32.mrb[0].mxu0
        %v445 = vadd.f32 0.0, %v444
        %v446 = vpop.f32.mrb[0].mxu0
        %v447 = vpop.f32.mrb[0].mxu0
        %v448 = vpop.f32.mrb[0].mxu0
        %449 = vdwg.mxu0
        %451 = vset.pattern.permute.xlu0 127
        %452 = vperm.xlu0 %451, %v403
        %v453 = vpop.permute.xlu0 %452
        %456 = vset.pattern.permute.xlu0 127
        %457 = vperm.xlu0 %456, %v406
        %v458 = vpop.permute.xlu0 %457
        %v460 = vlaneseq
        %v461 = vshrl.u32 %v460, 7
        %v462 = vsub.s32 0, %v461
        %v463 = vrot.slane %v445, %v462
        %v464 = vadd.f32 %v453, %v463
        %v465 = vadd.f32 %v458, %v463
        %vm466 = vcmp.gt.f32.partialorder %v464, 0.0
        %vm467 = vcmp.gt.f32.partialorder %v465, 0.0
        %v468 = vmul.f32 %v464, 0.2
        %v469 = vmul.f32 %v465, 0.2
        %v470 = vsel %vm466, %v464, %v468
        %v471 = vsel %vm467, %v465, %v469
        %v472 = vadd.f32 %v470, %v292
        %v473 = vadd.f32 %v471, %v293
        %vm474 = vcmask 130048
        %v475 = vsel %vm474, %v472, -inf
        %476 = vmax.xlane.f32.xlu0 %v475
        %v477 = vpop.xlane.xlu0 %476
        %v478 = vsel %vm474, %v473, -inf
        %479 = vmax.xlane.f32.xlu0 %v478
        %v480 = vpop.xlane.xlu0 %479
        %v481 = vsub.f32 %v472, %v477
        %v482 = vsub.f32 %v473, %v480
        %v483 = vmul.f32 %v481, 1.442695
        %v484 = vpow.pop %v483
        %v485 = vmul.f32 %v482, 1.442695
        %v486 = vpow.pop %v485
        %vm487 = vcmp.eq.s32.totalorder %v295, 126
        %v488 = vsel %vm487, 1.0, %v403
        %v489 = vsel %vm487, 1.0, %v406
        %v490 = vpack.c.bf16 %v486, %v484
        %v491 = vpack.c.bf16 %v489, %v488
        %v493 = vsel %vm474, %v490, 0
        %495 = vmatprep.subr.bf16.mxu0 0
        %496 = vmatpush1.bf16.msra.mxu0 %v491
        %497 = vmatprep.subr.bf16.mxu0 0
        %498 = vmatpush1.bf16.msra.mxu0 0
        %499 = vmatprep.subr.bf16.mxu0 0
        %500 = vmatpush1.bf16.msra.mxu0 0
        %501 = vmatprep.subr.bf16.mxu0 0
        %502 = vmatpush1.bf16.msra.mxu0 0
        %503 = vmatprep.subr.bf16.mxu0 0
        %504 = vmatpush1.bf16.msra.mxu0 0
        %505 = vmatprep.subr.bf16.mxu0 0
        %506 = vmatpush1.bf16.msra.mxu0 0
        %507 = vmatprep.subr.bf16.mxu0 0
        %508 = vmatpush1.bf16.msra.mxu0 0
        %509 = vmatprep.subr.bf16.mxu0 0
        %510 = vmatpush1.bf16.msra.mxu0 0
        %511 = vmatprep.subr.bf16.mxu0 0
        %512 = vmatpush1.bf16.msra.mxu0 0
        %513 = vmatprep.subr.bf16.mxu0 0
        %514 = vmatpush1.bf16.msra.mxu0 0
        %515 = vmatprep.subr.bf16.mxu0 0
        %516 = vmatpush1.bf16.msra.mxu0 0
        %517 = vmatprep.subr.bf16.mxu0 0
        %518 = vmatpush1.bf16.msra.mxu0 0
        %519 = vmatprep.subr.bf16.mxu0 0
        %520 = vmatpush1.bf16.msra.mxu0 0
        %521 = vmatprep.subr.bf16.mxu0 0
        %522 = vmatpush1.bf16.msra.mxu0 0
        %523 = vmatprep.subr.bf16.mxu0 0
        %524 = vmatpush1.bf16.msra.mxu0 0
        %525 = vmatprep.subr.bf16.mxu0 0
        %526 = vmatpush1.bf16.msra.mxu0 0
        %527 = vmatprep.mubr.bf16.mxu0 0
        %528 = vmatmul.mubr.bf16.gmra.mrb[0].mxu0 %v493
        %v529 = vpop.f32.mrb[0].mxu0
        %v530 = vadd.f32 0.0, %v529
        %v531 = vpop.f32.mrb[0].mxu0
        %v532 = vpop.f32.mrb[0].mxu0
        %v533 = vadd.f32 0.0, %v532
        %v534 = vpop.f32.mrb[0].mxu0
        %535 = vdwg.mxu0
        %v536 = vrcp.pop %v530
        %v537 = vrcp.pop %v533
        %539 = vset.pattern.permute.xlu0 126
        %540 = vperm.xlu0 %539, %v536
        %v541 = vpop.permute.xlu0 %540
        %544 = vset.pattern.permute.xlu0 126
        %545 = vperm.xlu0 %544, %v537
        %v546 = vpop.permute.xlu0 %545
        %v548 = vmul.f32 %v530, %v541
        %v549 = vmul.f32 %v533, %v546
        %v550 = vld [vmem:[%s4] sm:$0x1]
        %v552 = vlaneseq
        %v553 = vshrl.u32 %v552, 7
        %v554 = vsub.s32 0, %v553
        %v555 = vrot.slane %v550, %v554
        %v557 = vadd.f32 %v548, %v555
        %v558 = vadd.f32 %v549, %v555
        %v559 = vmax.f32 %v557, 0.0
        %v560 = vmax.f32 %v558, 0.0
        %v561 = vpack.c.bf16 %v560, %v559
        %s562 = scalar_lea.vmem %s2, 64
        %v563 = vld [vmem:[%s562] sm:$0xf]
        %v564 = vld [vmem:[%s562 + $0x4] sm:$0xf]
        %v565 = vld [vmem:[%s562 + $0x8] sm:$0xf]
        %v566 = vld [vmem:[%s562 + $0xc] sm:$0xf]
        %v567 = vld [vmem:[%s562 + $0x10] sm:$0xf]
        %v568 = vld [vmem:[%s562 + $0x14] sm:$0xf]
        %v569 = vld [vmem:[%s562 + $0x18] sm:$0xf]
        %v570 = vld [vmem:[%s562 + $0x1c] sm:$0xf]
        %v571 = vld [vmem:[%s562 + $0x20] sm:$0xf]
        %v572 = vld [vmem:[%s562 + $0x24] sm:$0xf]
        %v573 = vld [vmem:[%s562 + $0x28] sm:$0xf]
        %v574 = vld [vmem:[%s562 + $0x2c] sm:$0xf]
        %v575 = vld [vmem:[%s562 + $0x30] sm:$0xf]
        %v576 = vld [vmem:[%s562 + $0x34] sm:$0xf]
        %v577 = vld [vmem:[%s562 + $0x38] sm:$0xf]
        %v578 = vld [vmem:[%s562 + $0x3c] sm:$0xf]
        %v595 = vunpack.c.l.b16 %v563
        %v596 = vunpack.c.l.b16 %v564
        %v597 = vunpack.c.l.b16 %v565
        %v598 = vunpack.c.l.b16 %v566
        %v599 = vunpack.c.l.b16 %v567
        %v600 = vunpack.c.l.b16 %v568
        %v601 = vunpack.c.l.b16 %v569
        %v602 = vunpack.c.l.b16 %v570
        %v603 = vunpack.c.l.b16 %v571
        %v604 = vunpack.c.l.b16 %v572
        %v605 = vunpack.c.l.b16 %v573
        %v606 = vunpack.c.l.b16 %v574
        %v607 = vunpack.c.l.b16 %v575
        %v608 = vunpack.c.l.b16 %v576
        %v609 = vunpack.c.l.b16 %v577
        %v610 = vunpack.c.l.b16 %v578
        %v611 = vpack.c.b16 %v596, %v595
        %v612 = vpack.c.b16 %v598, %v597
        %v613 = vpack.c.b16 %v600, %v599
        %v614 = vpack.c.b16 %v602, %v601
        %v615 = vpack.c.b16 %v604, %v603
        %v616 = vpack.c.b16 %v606, %v605
        %v617 = vpack.c.b16 %v608, %v607
        %v618 = vpack.c.b16 %v610, %v609
        %627 = vmatprep.subr.bf16.mxu0 0
        %628 = vmatpush1.bf16.msra.mxu0 %v611
        %629 = vmatprep.subr.bf16.mxu0 0
        %630 = vmatpush1.bf16.msra.mxu0 %v612
        %631 = vmatprep.subr.bf16.mxu0 0
        %632 = vmatpush1.bf16.msra.mxu0 %v613
        %633 = vmatprep.subr.bf16.mxu0 0
        %634 = vmatpush1.bf16.msra.mxu0 %v614
        %635 = vmatprep.subr.bf16.mxu0 0
        %636 = vmatpush1.bf16.msra.mxu0 %v615
        %637 = vmatprep.subr.bf16.mxu0 0
        %638 = vmatpush1.bf16.msra.mxu0 %v616
        %639 = vmatprep.subr.bf16.mxu0 0
        %640 = vmatpush1.bf16.msra.mxu0 %v617
        %641 = vmatprep.subr.bf16.mxu0 0
        %642 = vmatpush1.bf16.msra.mxu0 %v618
        %643 = vmatprep.subr.bf16.mxu0 0
        %644 = vmatpush1.bf16.msra.mxu0 0
        %645 = vmatprep.subr.bf16.mxu0 0
        %646 = vmatpush1.bf16.msra.mxu0 0
        %647 = vmatprep.subr.bf16.mxu0 0
        %648 = vmatpush1.bf16.msra.mxu0 0
        %649 = vmatprep.subr.bf16.mxu0 0
        %650 = vmatpush1.bf16.msra.mxu0 0
        %651 = vmatprep.subr.bf16.mxu0 0
        %652 = vmatpush1.bf16.msra.mxu0 0
        %653 = vmatprep.subr.bf16.mxu0 0
        %654 = vmatpush1.bf16.msra.mxu0 0
        %655 = vmatprep.subr.bf16.mxu0 0
        %656 = vmatpush1.bf16.msra.mxu0 0
        %657 = vmatprep.subr.bf16.mxu0 0
        %658 = vmatpush1.bf16.msra.mxu0 0
        %659 = vmatprep.mubr.bf16.mxu0 0
        %660 = vmatmul.mubr.bf16.gmra.mrb[0].mxu0 %v561
        %v661 = vpop.f32.mrb[0].mxu0
        %v662 = vadd.f32 0.0, %v661
        %v663 = vpop.f32.mrb[0].mxu0
        %v664 = vpop.f32.mrb[0].mxu0
        %v665 = vadd.f32 0.0, %v664
        %v666 = vpop.f32.mrb[0].mxu0
        %667 = vdwg.mxu0
        %s668 = scalar_lea.vmem %s3, 1
        %v669 = vld [vmem:[%s668] sm:$0x1]
        %670 = vmatprep.subr.bf16.mxu0 0
        %671 = vmatpush1.bf16.xpose.msra.mxu0 %v561
        %672 = vmatprep.subr.bf16.mxu0 0
        %673 = vmatpush1.bf16.xpose.msra.mxu0 0
        %674 = vmatprep.subr.bf16.mxu0 0
        %675 = vmatpush1.bf16.xpose.msra.mxu0 0
        %676 = vmatprep.subr.bf16.mxu0 0
        %677 = vmatpush1.bf16.xpose.msra.mxu0 0
        %678 = vmatprep.subr.bf16.mxu0 0
        %679 = vmatpush1.bf16.xpose.msra.mxu0 0
        %680 = vmatprep.subr.bf16.mxu0 0
        %681 = vmatpush1.bf16.xpose.msra.mxu0 0
        %682 = vmatprep.subr.bf16.mxu0 0
        %683 = vmatpush1.bf16.xpose.msra.mxu0 0
        %684 = vmatprep.subr.bf16.mxu0 0
        %685 = vmatpush1.bf16.xpose.msra.mxu0 0
        %686 = vmatprep.subr.bf16.mxu0 0
        %687 = vmatpush1.bf16.xpose.msra.mxu0 0
        %688 = vmatprep.subr.bf16.mxu0 0
        %689 = vmatpush1.bf16.xpose.msra.mxu0 0
        %690 = vmatprep.subr.bf16.mxu0 0
        %691 = vmatpush1.bf16.xpose.msra.mxu0 0
        %692 = vmatprep.subr.bf16.mxu0 0
        %693 = vmatpush1.bf16.xpose.msra.mxu0 0
        %694 = vmatprep.subr.bf16.mxu0 0
        %695 = vmatpush1.bf16.xpose.msra.mxu0 0
        %696 = vmatprep.subr.bf16.mxu0 0
        %697 = vmatpush1.bf16.xpose.msra.mxu0 0
        %698 = vmatprep.subr.bf16.mxu0 0
        %699 = vmatpush1.bf16.xpose.msra.mxu0 0
        %700 = vmatprep.subr.bf16.mxu0 0
        %701 = vmatpush1.bf16.xpose.msra.mxu0 0
        %702 = vmatprep.mubr.bf16.mxu0 0
        %703 = vmatmul.mubr.bf16.gmra.mrb[0].mxu0 %v669
        %v704 = vpop.f32.mrb[0].mxu0
        %v705 = vadd.f32 0.0, %v704
        %v706 = vpop.f32.mrb[0].mxu0
        %v707 = vpop.f32.mrb[0].mxu0
        %v708 = vpop.f32.mrb[0].mxu0
        %709 = vdwg.mxu0
        %711 = vset.pattern.permute.xlu0 127
        %712 = vperm.xlu0 %711, %v662
        %v713 = vpop.permute.xlu0 %712
        %716 = vset.pattern.permute.xlu0 127
        %717 = vperm.xlu0 %716, %v665
        %v718 = vpop.permute.xlu0 %717
        %v720 = vlaneseq
        %v721 = vshrl.u32 %v720, 7
        %v722 = vsub.s32 0, %v721
        %v723 = vrot.slane %v705, %v722
        %v724 = vadd.f32 %v713, %v723
        %v725 = vadd.f32 %v718, %v723
        %vm726 = vcmp.gt.f32.partialorder %v724, 0.0
        %vm727 = vcmp.gt.f32.partialorder %v725, 0.0
        %v728 = vmul.f32 %v724, 0.2
        %v729 = vmul.f32 %v725, 0.2
        %v730 = vsel %vm726, %v724, %v728
        %v731 = vsel %vm727, %v725, %v729
        %v732 = vadd.f32 %v730, %v292
        %v733 = vadd.f32 %v731, %v293
        %v734 = vsel %vm474, %v732, -inf
        %735 = vmax.xlane.f32.xlu0 %v734
        %v736 = vpop.xlane.xlu0 %735
        %v737 = vsel %vm474, %v733, -inf
        %738 = vmax.xlane.f32.xlu0 %v737
        %v739 = vpop.xlane.xlu0 %738
        %v740 = vsub.f32 %v732, %v736
        %v741 = vsub.f32 %v733, %v739
        %v742 = vmul.f32 %v740, 1.442695
        %v743 = vpow.pop %v742
        %v744 = vmul.f32 %v741, 1.442695
        %v745 = vpow.pop %v744
        %v746 = vsel %vm487, 1.0, %v662
        %v747 = vsel %vm487, 1.0, %v665
        %v748 = vpack.c.bf16 %v745, %v743
        %v749 = vpack.c.bf16 %v747, %v746
        %v751 = vsel %vm474, %v748, 0
        %753 = vmatprep.subr.bf16.mxu0 0
        %754 = vmatpush1.bf16.msra.mxu0 %v749
        %755 = vmatprep.subr.bf16.mxu0 0
        %756 = vmatpush1.bf16.msra.mxu0 0
        %757 = vmatprep.subr.bf16.mxu0 0
        %758 = vmatpush1.bf16.msra.mxu0 0
        %759 = vmatprep.subr.bf16.mxu0 0
        %760 = vmatpush1.bf16.msra.mxu0 0
        %761 = vmatprep.subr.bf16.mxu0 0
        %762 = vmatpush1.bf16.msra.mxu0 0
        %763 = vmatprep.subr.bf16.mxu0 0
        %764 = vmatpush1.bf16.msra.mxu0 0
        %765 = vmatprep.subr.bf16.mxu0 0
        %766 = vmatpush1.bf16.msra.mxu0 0
        %767 = vmatprep.subr.bf16.mxu0 0
        %768 = vmatpush1.bf16.msra.mxu0 0
        %769 = vmatprep.subr.bf16.mxu0 0
        %770 = vmatpush1.bf16.msra.mxu0 0
        %771 = vmatprep.subr.bf16.mxu0 0
        %772 = vmatpush1.bf16.msra.mxu0 0
        %773 = vmatprep.subr.bf16.mxu0 0
        %774 = vmatpush1.bf16.msra.mxu0 0
        %775 = vmatprep.subr.bf16.mxu0 0
        %776 = vmatpush1.bf16.msra.mxu0 0
        %777 = vmatprep.subr.bf16.mxu0 0
        %778 = vmatpush1.bf16.msra.mxu0 0
        %779 = vmatprep.subr.bf16.mxu0 0
        %780 = vmatpush1.bf16.msra.mxu0 0
        %781 = vmatprep.subr.bf16.mxu0 0
        %782 = vmatpush1.bf16.msra.mxu0 0
        %783 = vmatprep.subr.bf16.mxu0 0
        %784 = vmatpush1.bf16.msra.mxu0 0
        %785 = vmatprep.mubr.bf16.mxu0 0
        %786 = vmatmul.mubr.bf16.gmra.mrb[0].mxu0 %v751
        %v787 = vpop.f32.mrb[0].mxu0
        %v788 = vadd.f32 0.0, %v787
        %v789 = vpop.f32.mrb[0].mxu0
        %v790 = vpop.f32.mrb[0].mxu0
        %v791 = vadd.f32 0.0, %v790
        %v792 = vpop.f32.mrb[0].mxu0
        %793 = vdwg.mxu0
        %v794 = vrcp.pop %v788
        %v795 = vrcp.pop %v791
        %797 = vset.pattern.permute.xlu0 126
        %798 = vperm.xlu0 %797, %v794
        %v799 = vpop.permute.xlu0 %798
        %802 = vset.pattern.permute.xlu0 126
        %803 = vperm.xlu0 %802, %v795
        %v804 = vpop.permute.xlu0 %803
        %v806 = vmul.f32 %v788, %v799
        %v807 = vmul.f32 %v791, %v804
        %s808 = scalar_lea.vmem %s4, 1
        %v809 = vld [vmem:[%s808] sm:$0x1]
        %v811 = vlaneseq
        %v812 = vshrl.u32 %v811, 7
        %v813 = vsub.s32 0, %v812
        %v814 = vrot.slane %v809, %v813
        %v816 = vadd.f32 %v806, %v814
        %v817 = vadd.f32 %v807, %v814
        %v818 = vpack.c.bf16 %v817, %v816
        %s819 = scalar_lea.vmem %s2, 128
        %v820 = vld [vmem:[%s819] sm:$0xf]
        %v821 = vld [vmem:[%s819 + $0x4] sm:$0xf]
        %v822 = vld [vmem:[%s819 + $0x8] sm:$0xf]
        %v823 = vld [vmem:[%s819 + $0xc] sm:$0xf]
        %v824 = vld [vmem:[%s819 + $0x10] sm:$0xf]
        %v825 = vld [vmem:[%s819 + $0x14] sm:$0xf]
        %v826 = vld [vmem:[%s819 + $0x18] sm:$0xf]
        %v827 = vld [vmem:[%s819 + $0x1c] sm:$0xf]
        %v828 = vld [vmem:[%s819 + $0x20] sm:$0xf]
        %v829 = vld [vmem:[%s819 + $0x24] sm:$0xf]
        %v830 = vld [vmem:[%s819 + $0x28] sm:$0xf]
        %v831 = vld [vmem:[%s819 + $0x2c] sm:$0xf]
        %v832 = vld [vmem:[%s819 + $0x30] sm:$0xf]
        %v833 = vld [vmem:[%s819 + $0x34] sm:$0xf]
        %v834 = vld [vmem:[%s819 + $0x38] sm:$0xf]
        %v835 = vld [vmem:[%s819 + $0x3c] sm:$0xf]
        %v852 = vunpack.c.l.b16 %v820
        %v853 = vunpack.c.l.b16 %v821
        %v854 = vunpack.c.l.b16 %v822
        %v855 = vunpack.c.l.b16 %v823
        %v856 = vunpack.c.l.b16 %v824
        %v857 = vunpack.c.l.b16 %v825
        %v858 = vunpack.c.l.b16 %v826
        %v859 = vunpack.c.l.b16 %v827
        %v860 = vunpack.c.l.b16 %v828
        %v861 = vunpack.c.l.b16 %v829
        %v862 = vunpack.c.l.b16 %v830
        %v863 = vunpack.c.l.b16 %v831
        %v864 = vunpack.c.l.b16 %v832
        %v865 = vunpack.c.l.b16 %v833
        %v866 = vunpack.c.l.b16 %v834
        %v867 = vunpack.c.l.b16 %v835
        %v868 = vpack.c.b16 %v853, %v852
        %v869 = vpack.c.b16 %v855, %v854
        %v870 = vpack.c.b16 %v857, %v856
        %v871 = vpack.c.b16 %v859, %v858
        %v872 = vpack.c.b16 %v861, %v860
        %v873 = vpack.c.b16 %v863, %v862
        %v874 = vpack.c.b16 %v865, %v864
        %v875 = vpack.c.b16 %v867, %v866
        %884 = vmatprep.subr.bf16.mxu0 0
        %885 = vmatpush1.bf16.msra.mxu0 %v868
        %886 = vmatprep.subr.bf16.mxu0 0
        %887 = vmatpush1.bf16.msra.mxu0 %v869
        %888 = vmatprep.subr.bf16.mxu0 0
        %889 = vmatpush1.bf16.msra.mxu0 %v870
        %890 = vmatprep.subr.bf16.mxu0 0
        %891 = vmatpush1.bf16.msra.mxu0 %v871
        %892 = vmatprep.subr.bf16.mxu0 0
        %893 = vmatpush1.bf16.msra.mxu0 %v872
        %894 = vmatprep.subr.bf16.mxu0 0
        %895 = vmatpush1.bf16.msra.mxu0 %v873
        %896 = vmatprep.subr.bf16.mxu0 0
        %897 = vmatpush1.bf16.msra.mxu0 %v874
        %898 = vmatprep.subr.bf16.mxu0 0
        %899 = vmatpush1.bf16.msra.mxu0 %v875
        %900 = vmatprep.subr.bf16.mxu0 0
        %901 = vmatpush1.bf16.msra.mxu0 0
        %902 = vmatprep.subr.bf16.mxu0 0
        %903 = vmatpush1.bf16.msra.mxu0 0
        %904 = vmatprep.subr.bf16.mxu0 0
        %905 = vmatpush1.bf16.msra.mxu0 0
        %906 = vmatprep.subr.bf16.mxu0 0
        %907 = vmatpush1.bf16.msra.mxu0 0
        %908 = vmatprep.subr.bf16.mxu0 0
        %909 = vmatpush1.bf16.msra.mxu0 0
        %910 = vmatprep.subr.bf16.mxu0 0
        %911 = vmatpush1.bf16.msra.mxu0 0
        %912 = vmatprep.subr.bf16.mxu0 0
        %913 = vmatpush1.bf16.msra.mxu0 0
        %914 = vmatprep.subr.bf16.mxu0 0
        %915 = vmatpush1.bf16.msra.mxu0 0
        %916 = vmatprep.mubr.bf16.mxu0 0
        %917 = vmatmul.mubr.bf16.gmra.mrb[0].mxu0 %v818
        %v918 = vpop.f32.mrb[0].mxu0
        %v919 = vadd.f32 0.0, %v918
        %v920 = vpop.f32.mrb[0].mxu0
        %v921 = vpop.f32.mrb[0].mxu0
        %v922 = vadd.f32 0.0, %v921
        %v923 = vpop.f32.mrb[0].mxu0
        %924 = vdwg.mxu0
        %s925 = scalar_lea.vmem %s3, 2
        %v926 = vld [vmem:[%s925] sm:$0x1]
        %927 = vmatprep.subr.bf16.mxu0 0
        %928 = vmatpush1.bf16.xpose.msra.mxu0 %v818
        %929 = vmatprep.subr.bf16.mxu0 0
        %930 = vmatpush1.bf16.xpose.msra.mxu0 0
        %931 = vmatprep.subr.bf16.mxu0 0
        %932 = vmatpush1.bf16.xpose.msra.mxu0 0
        %933 = vmatprep.subr.bf16.mxu0 0
        %934 = vmatpush1.bf16.xpose.msra.mxu0 0
        %935 = vmatprep.subr.bf16.mxu0 0
        %936 = vmatpush1.bf16.xpose.msra.mxu0 0
        %937 = vmatprep.subr.bf16.mxu0 0
        %938 = vmatpush1.bf16.xpose.msra.mxu0 0
        %939 = vmatprep.subr.bf16.mxu0 0
        %940 = vmatpush1.bf16.xpose.msra.mxu0 0
        %941 = vmatprep.subr.bf16.mxu0 0
        %942 = vmatpush1.bf16.xpose.msra.mxu0 0
        %943 = vmatprep.subr.bf16.mxu0 0
        %944 = vmatpush1.bf16.xpose.msra.mxu0 0
        %945 = vmatprep.subr.bf16.mxu0 0
        %946 = vmatpush1.bf16.xpose.msra.mxu0 0
        %947 = vmatprep.subr.bf16.mxu0 0
        %948 = vmatpush1.bf16.xpose.msra.mxu0 0
        %949 = vmatprep.subr.bf16.mxu0 0
        %950 = vmatpush1.bf16.xpose.msra.mxu0 0
        %951 = vmatprep.subr.bf16.mxu0 0
        %952 = vmatpush1.bf16.xpose.msra.mxu0 0
        %953 = vmatprep.subr.bf16.mxu0 0
        %954 = vmatpush1.bf16.xpose.msra.mxu0 0
        %955 = vmatprep.subr.bf16.mxu0 0
        %956 = vmatpush1.bf16.xpose.msra.mxu0 0
        %957 = vmatprep.subr.bf16.mxu0 0
        %958 = vmatpush1.bf16.xpose.msra.mxu0 0
        %959 = vmatprep.mubr.bf16.mxu0 0
        %960 = vmatmul.mubr.bf16.gmra.mrb[0].mxu0 %v926
        %v961 = vpop.f32.mrb[0].mxu0
        %v962 = vadd.f32 0.0, %v961
        %v963 = vpop.f32.mrb[0].mxu0
        %v964 = vpop.f32.mrb[0].mxu0
        %v965 = vpop.f32.mrb[0].mxu0
        %966 = vdwg.mxu0
        %968 = vset.pattern.permute.xlu0 127
        %969 = vperm.xlu0 %968, %v919
        %v970 = vpop.permute.xlu0 %969
        %973 = vset.pattern.permute.xlu0 127
        %974 = vperm.xlu0 %973, %v922
        %v975 = vpop.permute.xlu0 %974
        %v977 = vlaneseq
        %v978 = vshrl.u32 %v977, 7
        %v979 = vsub.s32 0, %v978
        %v980 = vrot.slane %v962, %v979
        %v981 = vadd.f32 %v970, %v980
        %v982 = vadd.f32 %v975, %v980
        %vm983 = vcmp.gt.f32.partialorder %v981, 0.0
        %vm984 = vcmp.gt.f32.partialorder %v982, 0.0
        %v985 = vmul.f32 %v981, 0.2
        %v986 = vmul.f32 %v982, 0.2
        %v987 = vsel %vm983, %v981, %v985
        %v988 = vsel %vm984, %v982, %v986
        %v989 = vadd.f32 %v987, %v292
        %v990 = vadd.f32 %v988, %v293
        %v991 = vsel %vm474, %v989, -inf
        %992 = vmax.xlane.f32.xlu0 %v991
        %v993 = vpop.xlane.xlu0 %992
        %v994 = vsel %vm474, %v990, -inf
        %995 = vmax.xlane.f32.xlu0 %v994
        %v996 = vpop.xlane.xlu0 %995
        %v997 = vsub.f32 %v989, %v993
        %v998 = vsub.f32 %v990, %v996
        %v999 = vmul.f32 %v997, 1.442695
        %v1000 = vpow.pop %v999
        %v1001 = vmul.f32 %v998, 1.442695
        %v1002 = vpow.pop %v1001
        %v1003 = vsel %vm487, 1.0, %v919
        %v1004 = vsel %vm487, 1.0, %v922
        %v1005 = vpack.c.bf16 %v1002, %v1000
        %v1006 = vpack.c.bf16 %v1004, %v1003
        %v1008 = vsel %vm474, %v1005, 0
        %1010 = vmatprep.subr.bf16.mxu0 0
        %1011 = vmatpush1.bf16.msra.mxu0 %v1006
        %1012 = vmatprep.subr.bf16.mxu0 0
        %1013 = vmatpush1.bf16.msra.mxu0 0
        %1014 = vmatprep.subr.bf16.mxu0 0
        %1015 = vmatpush1.bf16.msra.mxu0 0
        %1016 = vmatprep.subr.bf16.mxu0 0
        %1017 = vmatpush1.bf16.msra.mxu0 0
        %1018 = vmatprep.subr.bf16.mxu0 0
        %1019 = vmatpush1.bf16.msra.mxu0 0
        %1020 = vmatprep.subr.bf16.mxu0 0
        %1021 = vmatpush1.bf16.msra.mxu0 0
        %1022 = vmatprep.subr.bf16.mxu0 0
        %1023 = vmatpush1.bf16.msra.mxu0 0
        %1024 = vmatprep.subr.bf16.mxu0 0
        %1025 = vmatpush1.bf16.msra.mxu0 0
        %1026 = vmatprep.subr.bf16.mxu0 0
        %1027 = vmatpush1.bf16.msra.mxu0 0
        %1028 = vmatprep.subr.bf16.mxu0 0
        %1029 = vmatpush1.bf16.msra.mxu0 0
        %1030 = vmatprep.subr.bf16.mxu0 0
        %1031 = vmatpush1.bf16.msra.mxu0 0
        %1032 = vmatprep.subr.bf16.mxu0 0
        %1033 = vmatpush1.bf16.msra.mxu0 0
        %1034 = vmatprep.subr.bf16.mxu0 0
        %1035 = vmatpush1.bf16.msra.mxu0 0
        %1036 = vmatprep.subr.bf16.mxu0 0
        %1037 = vmatpush1.bf16.msra.mxu0 0
        %1038 = vmatprep.subr.bf16.mxu0 0
        %1039 = vmatpush1.bf16.msra.mxu0 0
        %1040 = vmatprep.subr.bf16.mxu0 0
        %1041 = vmatpush1.bf16.msra.mxu0 0
        %1042 = vmatprep.mubr.bf16.mxu0 0
        %1043 = vmatmul.mubr.bf16.gmra.mrb[0].mxu0 %v1008
        %v1044 = vpop.f32.mrb[0].mxu0
        %v1045 = vadd.f32 0.0, %v1044
        %v1046 = vpop.f32.mrb[0].mxu0
        %v1047 = vpop.f32.mrb[0].mxu0
        %v1048 = vadd.f32 0.0, %v1047
        %v1049 = vpop.f32.mrb[0].mxu0
        %1050 = vdwg.mxu0
        %v1051 = vrcp.pop %v1045
        %v1052 = vrcp.pop %v1048
        %1054 = vset.pattern.permute.xlu0 126
        %1055 = vperm.xlu0 %1054, %v1051
        %v1056 = vpop.permute.xlu0 %1055
        %1059 = vset.pattern.permute.xlu0 126
        %1060 = vperm.xlu0 %1059, %v1052
        %v1061 = vpop.permute.xlu0 %1060
        %v1063 = vmul.f32 %v1045, %v1056
        %v1064 = vmul.f32 %v1048, %v1061
        %s1065 = scalar_lea.vmem %s4, 2
        %v1066 = vld [vmem:[%s1065] sm:$0x1]
        %v1068 = vlaneseq
        %v1069 = vshrl.u32 %v1068, 7
        %v1070 = vsub.s32 0, %v1069
        %v1071 = vrot.slane %v1066, %v1070
        %v1073 = vadd.f32 %v1063, %v1071
        %v1074 = vadd.f32 %v1064, %v1071
        %v1075 = vmax.f32 %v1073, 0.0
        %v1076 = vmax.f32 %v1074, 0.0
        %v1077 = vpack.c.bf16 %v1076, %v1075
        %s1078 = scalar_lea.vmem %s2, 192
        %v1079 = vld [vmem:[%s1078] sm:$0xf]
        %v1080 = vld [vmem:[%s1078 + $0x4] sm:$0xf]
        %v1081 = vld [vmem:[%s1078 + $0x8] sm:$0xf]
        %v1082 = vld [vmem:[%s1078 + $0xc] sm:$0xf]
        %v1083 = vld [vmem:[%s1078 + $0x10] sm:$0xf]
        %v1084 = vld [vmem:[%s1078 + $0x14] sm:$0xf]
        %v1085 = vld [vmem:[%s1078 + $0x18] sm:$0xf]
        %v1086 = vld [vmem:[%s1078 + $0x1c] sm:$0xf]
        %v1087 = vld [vmem:[%s1078 + $0x20] sm:$0xf]
        %v1088 = vld [vmem:[%s1078 + $0x24] sm:$0xf]
        %v1089 = vld [vmem:[%s1078 + $0x28] sm:$0xf]
        %v1090 = vld [vmem:[%s1078 + $0x2c] sm:$0xf]
        %v1091 = vld [vmem:[%s1078 + $0x30] sm:$0xf]
        %v1092 = vld [vmem:[%s1078 + $0x34] sm:$0xf]
        %v1093 = vld [vmem:[%s1078 + $0x38] sm:$0xf]
        %v1094 = vld [vmem:[%s1078 + $0x3c] sm:$0xf]
        %v1111 = vunpack.c.l.b16 %v1079
        %v1112 = vunpack.c.l.b16 %v1080
        %v1113 = vunpack.c.l.b16 %v1081
        %v1114 = vunpack.c.l.b16 %v1082
        %v1115 = vunpack.c.l.b16 %v1083
        %v1116 = vunpack.c.l.b16 %v1084
        %v1117 = vunpack.c.l.b16 %v1085
        %v1118 = vunpack.c.l.b16 %v1086
        %v1119 = vunpack.c.l.b16 %v1087
        %v1120 = vunpack.c.l.b16 %v1088
        %v1121 = vunpack.c.l.b16 %v1089
        %v1122 = vunpack.c.l.b16 %v1090
        %v1123 = vunpack.c.l.b16 %v1091
        %v1124 = vunpack.c.l.b16 %v1092
        %v1125 = vunpack.c.l.b16 %v1093
        %v1126 = vunpack.c.l.b16 %v1094
        %v1127 = vpack.c.b16 %v1112, %v1111
        %v1128 = vpack.c.b16 %v1114, %v1113
        %v1129 = vpack.c.b16 %v1116, %v1115
        %v1130 = vpack.c.b16 %v1118, %v1117
        %v1131 = vpack.c.b16 %v1120, %v1119
        %v1132 = vpack.c.b16 %v1122, %v1121
        %v1133 = vpack.c.b16 %v1124, %v1123
        %v1134 = vpack.c.b16 %v1126, %v1125
        %1143 = vmatprep.subr.bf16.mxu0 0
        %1144 = vmatpush1.bf16.msra.mxu0 %v1127
        %1145 = vmatprep.subr.bf16.mxu0 0
        %1146 = vmatpush1.bf16.msra.mxu0 %v1128
        %1147 = vmatprep.subr.bf16.mxu0 0
        %1148 = vmatpush1.bf16.msra.mxu0 %v1129
        %1149 = vmatprep.subr.bf16.mxu0 0
        %1150 = vmatpush1.bf16.msra.mxu0 %v1130
        %1151 = vmatprep.subr.bf16.mxu0 0
        %1152 = vmatpush1.bf16.msra.mxu0 %v1131
        %1153 = vmatprep.subr.bf16.mxu0 0
        %1154 = vmatpush1.bf16.msra.mxu0 %v1132
        %1155 = vmatprep.subr.bf16.mxu0 0
        %1156 = vmatpush1.bf16.msra.mxu0 %v1133
        %1157 = vmatprep.subr.bf16.mxu0 0
        %1158 = vmatpush1.bf16.msra.mxu0 %v1134
        %1159 = vmatprep.subr.bf16.mxu0 0
        %1160 = vmatpush1.bf16.msra.mxu0 0
        %1161 = vmatprep.subr.bf16.mxu0 0
        %1162 = vmatpush1.bf16.msra.mxu0 0
        %1163 = vmatprep.subr.bf16.mxu0 0
        %1164 = vmatpush1.bf16.msra.mxu0 0
        %1165 = vmatprep.subr.bf16.mxu0 0
        %1166 = vmatpush1.bf16.msra.mxu0 0
        %1167 = vmatprep.subr.bf16.mxu0 0
        %1168 = vmatpush1.bf16.msra.mxu0 0
        %1169 = vmatprep.subr.bf16.mxu0 0
        %1170 = vmatpush1.bf16.msra.mxu0 0
        %1171 = vmatprep.subr.bf16.mxu0 0
        %1172 = vmatpush1.bf16.msra.mxu0 0
        %1173 = vmatprep.subr.bf16.mxu0 0
        %1174 = vmatpush1.bf16.msra.mxu0 0
        %1175 = vmatprep.mubr.bf16.mxu0 0
        %1176 = vmatmul.mubr.bf16.gmra.mrb[0].mxu0 %v1077
        %v1177 = vpop.f32.mrb[0].mxu0
        %v1178 = vadd.f32 0.0, %v1177
        %v1179 = vpop.f32.mrb[0].mxu0
        %v1180 = vpop.f32.mrb[0].mxu0
        %v1181 = vadd.f32 0.0, %v1180
        %v1182 = vpop.f32.mrb[0].mxu0
        %1183 = vdwg.mxu0
        %s1184 = scalar_lea.vmem %s3, 3
        %v1185 = vld [vmem:[%s1184] sm:$0x1]
        %1186 = vmatprep.subr.bf16.mxu0 0
        %1187 = vmatpush1.bf16.xpose.msra.mxu0 %v1077
        %1188 = vmatprep.subr.bf16.mxu0 0
        %1189 = vmatpush1.bf16.xpose.msra.mxu0 0
        %1190 = vmatprep.subr.bf16.mxu0 0
        %1191 = vmatpush1.bf16.xpose.msra.mxu0 0
        %1192 = vmatprep.subr.bf16.mxu0 0
        %1193 = vmatpush1.bf16.xpose.msra.mxu0 0
        %1194 = vmatprep.subr.bf16.mxu0 0
        %1195 = vmatpush1.bf16.xpose.msra.mxu0 0
        %1196 = vmatprep.subr.bf16.mxu0 0
        %1197 = vmatpush1.bf16.xpose.msra.mxu0 0
        %1198 = vmatprep.subr.bf16.mxu0 0
        %1199 = vmatpush1.bf16.xpose.msra.mxu0 0
        %1200 = vmatprep.subr.bf16.mxu0 0
        %1201 = vmatpush1.bf16.xpose.msra.mxu0 0
        %1202 = vmatprep.subr.bf16.mxu0 0
        %1203 = vmatpush1.bf16.xpose.msra.mxu0 0
        %1204 = vmatprep.subr.bf16.mxu0 0
        %1205 = vmatpush1.bf16.xpose.msra.mxu0 0
        %1206 = vmatprep.subr.bf16.mxu0 0
        %1207 = vmatpush1.bf16.xpose.msra.mxu0 0
        %1208 = vmatprep.subr.bf16.mxu0 0
        %1209 = vmatpush1.bf16.xpose.msra.mxu0 0
        %1210 = vmatprep.subr.bf16.mxu0 0
        %1211 = vmatpush1.bf16.xpose.msra.mxu0 0
        %1212 = vmatprep.subr.bf16.mxu0 0
        %1213 = vmatpush1.bf16.xpose.msra.mxu0 0
        %1214 = vmatprep.subr.bf16.mxu0 0
        %1215 = vmatpush1.bf16.xpose.msra.mxu0 0
        %1216 = vmatprep.subr.bf16.mxu0 0
        %1217 = vmatpush1.bf16.xpose.msra.mxu0 0
        %1218 = vmatprep.mubr.bf16.mxu0 0
        %1219 = vmatmul.mubr.bf16.gmra.mrb[0].mxu0 %v1185
        %v1220 = vpop.f32.mrb[0].mxu0
        %v1221 = vadd.f32 0.0, %v1220
        %v1222 = vpop.f32.mrb[0].mxu0
        %v1223 = vpop.f32.mrb[0].mxu0
        %v1224 = vpop.f32.mrb[0].mxu0
        %1225 = vdwg.mxu0
        %1227 = vset.pattern.permute.xlu0 127
        %1228 = vperm.xlu0 %1227, %v1178
        %v1229 = vpop.permute.xlu0 %1228
        %1232 = vset.pattern.permute.xlu0 127
        %1233 = vperm.xlu0 %1232, %v1181
        %v1234 = vpop.permute.xlu0 %1233
        %v1236 = vlaneseq
        %v1237 = vshrl.u32 %v1236, 7
        %v1238 = vsub.s32 0, %v1237
        %v1239 = vrot.slane %v1221, %v1238
        %v1240 = vadd.f32 %v1229, %v1239
        %v1241 = vadd.f32 %v1234, %v1239
        %vm1242 = vcmp.gt.f32.partialorder %v1240, 0.0
        %vm1243 = vcmp.gt.f32.partialorder %v1241, 0.0
        %v1244 = vmul.f32 %v1240, 0.2
        %v1245 = vmul.f32 %v1241, 0.2
        %v1246 = vsel %vm1242, %v1240, %v1244
        %v1247 = vsel %vm1243, %v1241, %v1245
        %v1248 = vadd.f32 %v1246, %v292
        %v1249 = vadd.f32 %v1247, %v293
        %v1250 = vsel %vm474, %v1248, -inf
        %1251 = vmax.xlane.f32.xlu0 %v1250
        %v1252 = vpop.xlane.xlu0 %1251
        %v1253 = vsel %vm474, %v1249, -inf
        %1254 = vmax.xlane.f32.xlu0 %v1253
        %v1255 = vpop.xlane.xlu0 %1254
        %v1256 = vsub.f32 %v1248, %v1252
        %v1257 = vsub.f32 %v1249, %v1255
        %v1258 = vmul.f32 %v1256, 1.442695
        %v1259 = vpow.pop %v1258
        %v1260 = vmul.f32 %v1257, 1.442695
        %v1261 = vpow.pop %v1260
        %v1262 = vsel %vm487, 1.0, %v1178
        %v1263 = vsel %vm487, 1.0, %v1181
        %v1264 = vpack.c.bf16 %v1261, %v1259
        %v1265 = vpack.c.bf16 %v1263, %v1262
        %v1267 = vsel %vm474, %v1264, 0
        %1269 = vmatprep.subr.bf16.mxu0 0
        %1270 = vmatpush1.bf16.msra.mxu0 %v1265
        %1271 = vmatprep.subr.bf16.mxu0 0
        %1272 = vmatpush1.bf16.msra.mxu0 0
        %1273 = vmatprep.subr.bf16.mxu0 0
        %1274 = vmatpush1.bf16.msra.mxu0 0
        %1275 = vmatprep.subr.bf16.mxu0 0
        %1276 = vmatpush1.bf16.msra.mxu0 0
        %1277 = vmatprep.subr.bf16.mxu0 0
        %1278 = vmatpush1.bf16.msra.mxu0 0
        %1279 = vmatprep.subr.bf16.mxu0 0
        %1280 = vmatpush1.bf16.msra.mxu0 0
        %1281 = vmatprep.subr.bf16.mxu0 0
        %1282 = vmatpush1.bf16.msra.mxu0 0
        %1283 = vmatprep.subr.bf16.mxu0 0
        %1284 = vmatpush1.bf16.msra.mxu0 0
        %1285 = vmatprep.subr.bf16.mxu0 0
        %1286 = vmatpush1.bf16.msra.mxu0 0
        %1287 = vmatprep.subr.bf16.mxu0 0
        %1288 = vmatpush1.bf16.msra.mxu0 0
        %1289 = vmatprep.subr.bf16.mxu0 0
        %1290 = vmatpush1.bf16.msra.mxu0 0
        %1291 = vmatprep.subr.bf16.mxu0 0
        %1292 = vmatpush1.bf16.msra.mxu0 0
        %1293 = vmatprep.subr.bf16.mxu0 0
        %1294 = vmatpush1.bf16.msra.mxu0 0
        %1295 = vmatprep.subr.bf16.mxu0 0
        %1296 = vmatpush1.bf16.msra.mxu0 0
        %1297 = vmatprep.subr.bf16.mxu0 0
        %1298 = vmatpush1.bf16.msra.mxu0 0
        %1299 = vmatprep.subr.bf16.mxu0 0
        %1300 = vmatpush1.bf16.msra.mxu0 0
        %1301 = vmatprep.mubr.bf16.mxu0 0
        %1302 = vmatmul.mubr.bf16.gmra.mrb[0].mxu0 %v1267
        %v1303 = vpop.f32.mrb[0].mxu0
        %v1304 = vadd.f32 0.0, %v1303
        %v1305 = vpop.f32.mrb[0].mxu0
        %v1306 = vpop.f32.mrb[0].mxu0
        %v1307 = vadd.f32 0.0, %v1306
        %v1308 = vpop.f32.mrb[0].mxu0
        %1309 = vdwg.mxu0
        %v1310 = vrcp.pop %v1304
        %v1311 = vrcp.pop %v1307
        %1313 = vset.pattern.permute.xlu0 126
        %1314 = vperm.xlu0 %1313, %v1310
        %v1315 = vpop.permute.xlu0 %1314
        %1318 = vset.pattern.permute.xlu0 126
        %1319 = vperm.xlu0 %1318, %v1311
        %v1320 = vpop.permute.xlu0 %1319
        %v1322 = vmul.f32 %v1304, %v1315
        %v1323 = vmul.f32 %v1307, %v1320
        %s1324 = scalar_lea.vmem %s4, 3
        %v1325 = vld [vmem:[%s1324] sm:$0x1]
        %v1327 = vlaneseq
        %v1328 = vshrl.u32 %v1327, 7
        %v1329 = vsub.s32 0, %v1328
        %v1330 = vrot.slane %v1325, %v1329
        %v1332 = vadd.f32 %v1322, %v1330
        %v1333 = vadd.f32 %v1323, %v1330
        %1334 = vst [vmem:[%s282] sm:$0xff] %v1332
        %1335 = vst [vmem:[%s282 + $0x8] sm:$0xff] %v1333
        %s1336 = scalar_lea.vmem %s2, 256
        %v1337 = vld [vmem:[%s1336] sm:$0xf]
        %v1338 = vld [vmem:[%s1336 + $0x4] sm:$0xf]
        %v1339 = vld [vmem:[%s1336 + $0x8] sm:$0xf]
        %v1340 = vld [vmem:[%s1336 + $0xc] sm:$0xf]
        %v1341 = vld [vmem:[%s1336 + $0x10] sm:$0xf]
        %v1342 = vld [vmem:[%s1336 + $0x14] sm:$0xf]
        %v1343 = vld [vmem:[%s1336 + $0x18] sm:$0xf]
        %v1344 = vld [vmem:[%s1336 + $0x1c] sm:$0xf]
        %v1345 = vld [vmem:[%s1336 + $0x20] sm:$0xf]
        %v1346 = vld [vmem:[%s1336 + $0x24] sm:$0xf]
        %v1347 = vld [vmem:[%s1336 + $0x28] sm:$0xf]
        %v1348 = vld [vmem:[%s1336 + $0x2c] sm:$0xf]
        %v1349 = vld [vmem:[%s1336 + $0x30] sm:$0xf]
        %v1350 = vld [vmem:[%s1336 + $0x34] sm:$0xf]
        %v1351 = vld [vmem:[%s1336 + $0x38] sm:$0xf]
        %v1352 = vld [vmem:[%s1336 + $0x3c] sm:$0xf]
        %v1369 = vunpack.c.l.b16 %v1337
        %v1370 = vunpack.c.l.b16 %v1338
        %v1371 = vunpack.c.l.b16 %v1339
        %v1372 = vunpack.c.l.b16 %v1340
        %v1373 = vunpack.c.l.b16 %v1341
        %v1374 = vunpack.c.l.b16 %v1342
        %v1375 = vunpack.c.l.b16 %v1343
        %v1376 = vunpack.c.l.b16 %v1344
        %v1377 = vunpack.c.l.b16 %v1345
        %v1378 = vunpack.c.l.b16 %v1346
        %v1379 = vunpack.c.l.b16 %v1347
        %v1380 = vunpack.c.l.b16 %v1348
        %v1381 = vunpack.c.l.b16 %v1349
        %v1382 = vunpack.c.l.b16 %v1350
        %v1383 = vunpack.c.l.b16 %v1351
        %v1384 = vunpack.c.l.b16 %v1352
        %v1385 = vpack.c.b16 %v1370, %v1369
        %v1386 = vpack.c.b16 %v1372, %v1371
        %v1387 = vpack.c.b16 %v1374, %v1373
        %v1388 = vpack.c.b16 %v1376, %v1375
        %v1389 = vpack.c.b16 %v1378, %v1377
        %v1390 = vpack.c.b16 %v1380, %v1379
        %v1391 = vpack.c.b16 %v1382, %v1381
        %v1392 = vpack.c.b16 %v1384, %v1383
        %1401 = vmatprep.subr.bf16.mxu0 0
        %1402 = vmatpush1.bf16.msra.mxu0 %v1385
        %1403 = vmatprep.subr.bf16.mxu0 0
        %1404 = vmatpush1.bf16.msra.mxu0 %v1386
        %1405 = vmatprep.subr.bf16.mxu0 0
        %1406 = vmatpush1.bf16.msra.mxu0 %v1387
        %1407 = vmatprep.subr.bf16.mxu0 0
        %1408 = vmatpush1.bf16.msra.mxu0 %v1388
        %1409 = vmatprep.subr.bf16.mxu0 0
        %1410 = vmatpush1.bf16.msra.mxu0 %v1389
        %1411 = vmatprep.subr.bf16.mxu0 0
        %1412 = vmatpush1.bf16.msra.mxu0 %v1390
        %1413 = vmatprep.subr.bf16.mxu0 0
        %1414 = vmatpush1.bf16.msra.mxu0 %v1391
        %1415 = vmatprep.subr.bf16.mxu0 0
        %1416 = vmatpush1.bf16.msra.mxu0 %v1392
        %1417 = vmatprep.subr.bf16.mxu0 0
        %1418 = vmatpush1.bf16.msra.mxu0 0
        %1419 = vmatprep.subr.bf16.mxu0 0
        %1420 = vmatpush1.bf16.msra.mxu0 0
        %1421 = vmatprep.subr.bf16.mxu0 0
        %1422 = vmatpush1.bf16.msra.mxu0 0
        %1423 = vmatprep.subr.bf16.mxu0 0
        %1424 = vmatpush1.bf16.msra.mxu0 0
        %1425 = vmatprep.subr.bf16.mxu0 0
        %1426 = vmatpush1.bf16.msra.mxu0 0
        %1427 = vmatprep.subr.bf16.mxu0 0
        %1428 = vmatpush1.bf16.msra.mxu0 0
        %1429 = vmatprep.subr.bf16.mxu0 0
        %1430 = vmatpush1.bf16.msra.mxu0 0
        %1431 = vmatprep.subr.bf16.mxu0 0
        %1432 = vmatpush1.bf16.msra.mxu0 0
        %1433 = vmatprep.mubr.bf16.mxu0 0
        %1434 = vmatmul.mubr.bf16.gmra.mrb[0].mxu0 %v818
        %v1435 = vpop.f32.mrb[0].mxu0
        %v1436 = vadd.f32 0.0, %v1435
        %v1437 = vpop.f32.mrb[0].mxu0
        %v1438 = vpop.f32.mrb[0].mxu0
        %v1439 = vadd.f32 0.0, %v1438
        %v1440 = vpop.f32.mrb[0].mxu0
        %1441 = vdwg.mxu0
        %s1442 = scalar_lea.vmem %s3, 4
        %v1443 = vld [vmem:[%s1442] sm:$0x1]
        %1444 = vmatprep.subr.bf16.mxu0 0
        %1445 = vmatpush1.bf16.xpose.msra.mxu0 %v818
        %1446 = vmatprep.subr.bf16.mxu0 0
        %1447 = vmatpush1.bf16.xpose.msra.mxu0 0
        %1448 = vmatprep.subr.bf16.mxu0 0
        %1449 = vmatpush1.bf16.xpose.msra.mxu0 0
        %1450 = vmatprep.subr.bf16.mxu0 0
        %1451 = vmatpush1.bf16.xpose.msra.mxu0 0
        %1452 = vmatprep.subr.bf16.mxu0 0
        %1453 = vmatpush1.bf16.xpose.msra.mxu0 0
        %1454 = vmatprep.subr.bf16.mxu0 0
        %1455 = vmatpush1.bf16.xpose.msra.mxu0 0
        %1456 = vmatprep.subr.bf16.mxu0 0
        %1457 = vmatpush1.bf16.xpose.msra.mxu0 0
        %1458 = vmatprep.subr.bf16.mxu0 0
        %1459 = vmatpush1.bf16.xpose.msra.mxu0 0
        %1460 = vmatprep.subr.bf16.mxu0 0
        %1461 = vmatpush1.bf16.xpose.msra.mxu0 0
        %1462 = vmatprep.subr.bf16.mxu0 0
        %1463 = vmatpush1.bf16.xpose.msra.mxu0 0
        %1464 = vmatprep.subr.bf16.mxu0 0
        %1465 = vmatpush1.bf16.xpose.msra.mxu0 0
        %1466 = vmatprep.subr.bf16.mxu0 0
        %1467 = vmatpush1.bf16.xpose.msra.mxu0 0
        %1468 = vmatprep.subr.bf16.mxu0 0
        %1469 = vmatpush1.bf16.xpose.msra.mxu0 0
        %1470 = vmatprep.subr.bf16.mxu0 0
        %1471 = vmatpush1.bf16.xpose.msra.mxu0 0
        %1472 = vmatprep.subr.bf16.mxu0 0
        %1473 = vmatpush1.bf16.xpose.msra.mxu0 0
        %1474 = vmatprep.subr.bf16.mxu0 0
        %1475 = vmatpush1.bf16.xpose.msra.mxu0 0
        %1476 = vmatprep.mubr.bf16.mxu0 0
        %1477 = vmatmul.mubr.bf16.gmra.mrb[0].mxu0 %v1443
        %v1478 = vpop.f32.mrb[0].mxu0
        %v1479 = vadd.f32 0.0, %v1478
        %v1480 = vpop.f32.mrb[0].mxu0
        %v1481 = vpop.f32.mrb[0].mxu0
        %v1482 = vpop.f32.mrb[0].mxu0
        %1483 = vdwg.mxu0
        %1485 = vset.pattern.permute.xlu0 127
        %1486 = vperm.xlu0 %1485, %v1436
        %v1487 = vpop.permute.xlu0 %1486
        %1490 = vset.pattern.permute.xlu0 127
        %1491 = vperm.xlu0 %1490, %v1439
        %v1492 = vpop.permute.xlu0 %1491
        %v1494 = vlaneseq
        %v1495 = vshrl.u32 %v1494, 7
        %v1496 = vsub.s32 0, %v1495
        %v1497 = vrot.slane %v1479, %v1496
        %v1498 = vadd.f32 %v1487, %v1497
        %v1499 = vadd.f32 %v1492, %v1497
        %vm1500 = vcmp.gt.f32.partialorder %v1498, 0.0
        %vm1501 = vcmp.gt.f32.partialorder %v1499, 0.0
        %v1502 = vmul.f32 %v1498, 0.2
        %v1503 = vmul.f32 %v1499, 0.2
        %v1504 = vsel %vm1500, %v1498, %v1502
        %v1505 = vsel %vm1501, %v1499, %v1503
        %v1506 = vadd.f32 %v1504, %v292
        %v1507 = vadd.f32 %v1505, %v293
        %v1508 = vsel %vm474, %v1506, -inf
        %1509 = vmax.xlane.f32.xlu0 %v1508
        %v1510 = vpop.xlane.xlu0 %1509
        %v1511 = vsel %vm474, %v1507, -inf
        %1512 = vmax.xlane.f32.xlu0 %v1511
        %v1513 = vpop.xlane.xlu0 %1512
        %v1514 = vsub.f32 %v1506, %v1510
        %v1515 = vsub.f32 %v1507, %v1513
        %v1516 = vmul.f32 %v1514, 1.442695
        %v1517 = vpow.pop %v1516
        %v1518 = vmul.f32 %v1515, 1.442695
        %v1519 = vpow.pop %v1518
        %v1520 = vsel %vm487, 1.0, %v1436
        %v1521 = vsel %vm487, 1.0, %v1439
        %v1522 = vpack.c.bf16 %v1519, %v1517
        %v1523 = vpack.c.bf16 %v1521, %v1520
        %v1525 = vsel %vm474, %v1522, 0
        %1527 = vmatprep.subr.bf16.mxu0 0
        %1528 = vmatpush1.bf16.msra.mxu0 %v1523
        %1529 = vmatprep.subr.bf16.mxu0 0
        %1530 = vmatpush1.bf16.msra.mxu0 0
        %1531 = vmatprep.subr.bf16.mxu0 0
        %1532 = vmatpush1.bf16.msra.mxu0 0
        %1533 = vmatprep.subr.bf16.mxu0 0
        %1534 = vmatpush1.bf16.msra.mxu0 0
        %1535 = vmatprep.subr.bf16.mxu0 0
        %1536 = vmatpush1.bf16.msra.mxu0 0
        %1537 = vmatprep.subr.bf16.mxu0 0
        %1538 = vmatpush1.bf16.msra.mxu0 0
        %1539 = vmatprep.subr.bf16.mxu0 0
        %1540 = vmatpush1.bf16.msra.mxu0 0
        %1541 = vmatprep.subr.bf16.mxu0 0
        %1542 = vmatpush1.bf16.msra.mxu0 0
        %1543 = vmatprep.subr.bf16.mxu0 0
        %1544 = vmatpush1.bf16.msra.mxu0 0
        %1545 = vmatprep.subr.bf16.mxu0 0
        %1546 = vmatpush1.bf16.msra.mxu0 0
        %1547 = vmatprep.subr.bf16.mxu0 0
        %1548 = vmatpush1.bf16.msra.mxu0 0
        %1549 = vmatprep.subr.bf16.mxu0 0
        %1550 = vmatpush1.bf16.msra.mxu0 0
        %1551 = vmatprep.subr.bf16.mxu0 0
        %1552 = vmatpush1.bf16.msra.mxu0 0
        %1553 = vmatprep.subr.bf16.mxu0 0
        %1554 = vmatpush1.bf16.msra.mxu0 0
        %1555 = vmatprep.subr.bf16.mxu0 0
        %1556 = vmatpush1.bf16.msra.mxu0 0
        %1557 = vmatprep.subr.bf16.mxu0 0
        %1558 = vmatpush1.bf16.msra.mxu0 0
        %1559 = vmatprep.mubr.bf16.mxu0 0
        %1560 = vmatmul.mubr.bf16.gmra.mrb[0].mxu0 %v1525
        %v1561 = vpop.f32.mrb[0].mxu0
        %v1562 = vadd.f32 0.0, %v1561
        %v1563 = vpop.f32.mrb[0].mxu0
        %v1564 = vpop.f32.mrb[0].mxu0
        %v1565 = vadd.f32 0.0, %v1564
        %v1566 = vpop.f32.mrb[0].mxu0
        %1567 = vdwg.mxu0
        %v1568 = vrcp.pop %v1562
        %v1569 = vrcp.pop %v1565
        %1571 = vset.pattern.permute.xlu0 126
        %1572 = vperm.xlu0 %1571, %v1568
        %v1573 = vpop.permute.xlu0 %1572
        %1576 = vset.pattern.permute.xlu0 126
        %1577 = vperm.xlu0 %1576, %v1569
        %v1578 = vpop.permute.xlu0 %1577
        %v1580 = vmul.f32 %v1562, %v1573
        %v1581 = vmul.f32 %v1565, %v1578
        %s1582 = scalar_lea.vmem %s4, 4
        %v1583 = vld [vmem:[%s1582] sm:$0x1]
        %v1585 = vlaneseq
        %v1586 = vshrl.u32 %v1585, 7
        %v1587 = vsub.s32 0, %v1586
        %v1588 = vrot.slane %v1583, %v1587
        %v1590 = vadd.f32 %v1580, %v1588
        %v1591 = vadd.f32 %v1581, %v1588
        %vm1592 = vcmp.ge.s32.totalorder %v295, 126
        %v1593 = vsel %vm1592, 0.0, %v1590
        %v1594 = vsel %vm1592, 0.0, %v1591
        %v1595 = vpack.c.bf16 %v1594, %v1593
        %1596 = vmatprep.subr.bf16.mxu0 0
        %1597 = vmatpush1.bf16.xpose.msra.mxu0 %v1595
        %1598 = vmatprep.subr.bf16.mxu0 0
        %1599 = vmatpush1.bf16.xpose.msra.mxu0 0
        %1600 = vmatprep.subr.bf16.mxu0 0
        %1601 = vmatpush1.bf16.xpose.msra.mxu0 0
        %1602 = vmatprep.subr.bf16.mxu0 0
        %1603 = vmatpush1.bf16.xpose.msra.mxu0 0
        %1604 = vmatprep.subr.bf16.mxu0 0
        %1605 = vmatpush1.bf16.xpose.msra.mxu0 0
        %1606 = vmatprep.subr.bf16.mxu0 0
        %1607 = vmatpush1.bf16.xpose.msra.mxu0 0
        %1608 = vmatprep.subr.bf16.mxu0 0
        %1609 = vmatpush1.bf16.xpose.msra.mxu0 0
        %1610 = vmatprep.subr.bf16.mxu0 0
        %1611 = vmatpush1.bf16.xpose.msra.mxu0 0
        %1612 = vmatprep.subr.bf16.mxu0 0
        %1613 = vmatpush1.bf16.xpose.msra.mxu0 0
        %1614 = vmatprep.subr.bf16.mxu0 0
        %1615 = vmatpush1.bf16.xpose.msra.mxu0 0
        %1616 = vmatprep.subr.bf16.mxu0 0
        %1617 = vmatpush1.bf16.xpose.msra.mxu0 0
        %1618 = vmatprep.subr.bf16.mxu0 0
        %1619 = vmatpush1.bf16.xpose.msra.mxu0 0
        %1620 = vmatprep.subr.bf16.mxu0 0
        %1621 = vmatpush1.bf16.xpose.msra.mxu0 0
        %1622 = vmatprep.subr.bf16.mxu0 0
        %1623 = vmatpush1.bf16.xpose.msra.mxu0 0
        %1624 = vmatprep.subr.bf16.mxu0 0
        %1625 = vmatpush1.bf16.xpose.msra.mxu0 0
        %1626 = vmatprep.subr.bf16.mxu0 0
        %1627 = vmatpush1.bf16.xpose.msra.mxu0 0
        %1628 = vmatprep.mubr.bf16.mxu0 0
        %1629 = vmatmul.mubr.bf16.gmra.mrb[0].mxu0 %v1595
        %v1630 = vpop.f32.mrb[0].mxu0
        %v1631 = vadd.f32 0.0, %v1630
        %v1632 = vpop.f32.mrb[0].mxu0
        %v1633 = vpop.f32.mrb[0].mxu0
        %v1634 = vadd.f32 0.0, %v1633
        %v1635 = vpop.f32.mrb[0].mxu0
        %1636 = vdwg.mxu0
        %1637 = vst.msk [vmem:[%s267] sm:$0xff] %vm474, %v1631
        %1638 = vst.msk [vmem:[%s267 + $0x8] sm:$0xff] %vm474, %v1634
        %p1639 = scmp.lt.s32.totalorder %s21, 1
        %s1640 = scalar_select %p1639, %s21, 1
        %s1641 = smul.addr %s1640, 2
        %s1642 = smul.addr %s1641, 8
        %s1643 = scalar_lea.vmem %s5, %s1642
        %s1644 = sand.u32 %s170, 1
        %s1645 = scalar_lea.sflag [#allocation3], %s1644
        %s1646 = sand.u32 %s170, 1
        %s1647 = smul.addr %s1646, 16
        %s1648 = scalar_lea.vmem [#allocation2], %s1647
        // Predicated region
        $region41: #{gae_forward.1} parent=39 // pred_check
          %p1649 = pneg %p154
        $region42: #{gae_forward.1} parent=39 // pred_check_branch
          %1651 = sbr.rel (%p1649) target = $region44
        $region43: #{gae_forward.1} parent=39 // pred_region
          _
        $region44: #{gae_forward.1} parent=39 // pred_fallthru
          _
        // Predicated region
        $region45: #{gae_forward.1} parent=39 // pred_check
          %p1652 = pneg %p180
        $region46: #{gae_forward.1} parent=39 // pred_check_branch
          %1654 = sbr.rel (%p1652) target = $region48
        $region47: #{gae_forward.1} parent=39 // pred_region
          %s1656 = ssub.s32 256, 256
          %1657 = vsyncadd %s1645, %s1656
          %s1658 = smul.addr %s21, 2
          %s1659 = smul.addr %s1658, 128
          %s1660 = scalar_lea.hbm %s6, %s1659
          %s1661 = sshll.u32 %s1648, 4
          %s1662 = int_to_ptr.vmem [resolvable:$true] %s1661
          %1667 = dma.vmem_to_hbm [thread:$0]  %s1662, 256, %s1660, %s1645, 128, 128, 8
        $region48: #{gae_forward.1} parent=39 // pred_fallthru
          _
      $region40: #{gae_forward.1} parent=5 // pred_fallthru
        _
      %p1668 = scmp.le.s32.totalorder 2, %s16
      // Predicated region
      $region49: #{gae_forward.1} parent=5 // pred_check
        %p1669 = pneg %p1668
      $region50: #{gae_forward.1} parent=5 // pred_check_branch
        %1671 = sbr.rel (%p1669) target = $region52
      $region51: #{gae_forward.1} parent=5 // pred_region
        %s1672 = ssub.s32 %s16, 2
        // Predicated region
        $region53: #{gae_forward.1} parent=51 // pred_check
          %p1673 = pneg %p160
        $region54: #{gae_forward.1} parent=51 // pred_check_branch
          %1675 = sbr.rel (%p1673) target = $region56
        $region55: #{gae_forward.1} parent=51 // pred_region
          %p1676 = scmp.lt.s32.totalorder %s22, 1
          %s1677 = scalar_select %p1676, %s22, 1
          %s1678 = smul.addr %s1677, 2
          %s1679 = smul.addr %s1678, 8
          %s1680 = scalar_lea.vmem %s5, %s1679
        $region56: #{gae_forward.1} parent=51 // pred_fallthru
          _
        // Predicated region
        $region57: #{gae_forward.1} parent=51 // pred_check
          %p1681 = pneg %p186
        $region58: #{gae_forward.1} parent=51 // pred_check_branch
          %1683 = sbr.rel (%p1681) target = $region60
        $region59: #{gae_forward.1} parent=51 // pred_region
          %s1684 = sand.u32 %s171, 1
          %s1685 = scalar_lea.sflag [#allocation3], %s1684
          %s1686 = sand.u32 %s171, 1
          %s1687 = smul.addr %s1686, 16
          %s1688 = scalar_lea.vmem [#allocation2], %s1687
          %1689 = dma.done %s1685, 256
        $region60: #{gae_forward.1} parent=51 // pred_fallthru
          _
      $region52: #{gae_forward.1} parent=5 // pred_fallthru
        _
    $region6: #{gae_forward.1} parent=1 // loop_footer
      %s20 = sadd.s32 1, %s16
    $region7: #{gae_forward.1} parent=1 // loop_footer_branch
      %15 = sbr.rel target = $region3
    $region8: #{gae_forward.1} parent=1 // loop_exit
      _
    %1690 = vsyncpa [#allocation3], 1
    %s1691 = scalar_lea.sflag [#allocation3], 1
    %1692 = vsyncpa %s1691, 1

</llo_original>
